<compile_context>
chip_gen: v6e
topology: v6e:2x2x1
jax: 0.10.0
libtpu: 0.0.40
codegen_flags: <defaults>
</compile_context>

<pallas_src>
import numpy as np
import jax
import jax.numpy as jnp
from jax.experimental import pallas as pl
from jax.experimental.pallas import tpu as pltpu

BN_EPS = 1e-5


def _conv_bn_relu(src_ref, w_ref, s_ref, t_ref, m_out):
    """Same-padded Conv1d over the flattened per-sample-padded buffer as K
    shifted matmuls (bf16 operands, f32 accumulation), then the folded
    BatchNorm affine + ReLU in f32."""
    k_taps = w_ref.shape[0]
    acc = jnp.dot(src_ref[pl.ds(0, m_out), :].astype(jnp.bfloat16), w_ref[0],
                  preferred_element_type=jnp.float32)
    for k in range(1, k_taps):                      # static unroll, K = 3
        acc = acc + jnp.dot(src_ref[pl.ds(k, m_out), :].astype(jnp.bfloat16),
                            w_ref[k], preferred_element_type=jnp.float32)
    return jnp.maximum(acc * s_ref[...] + t_ref[...], 0.0)


def _zero_halos(pad_ref, tb, p, c):
    """Zero the per-sample conv halo rows.  Adjacent samples' trailing+leading
    halos are contiguous -> TB+1 contiguous stores instead of 2*TB row stores.
    Runs every grid step (megacore-safe: no program_id gating)."""
    z1 = jnp.zeros((1, c), pad_ref.dtype)
    z2 = jnp.zeros((2, c), pad_ref.dtype)
    pad_ref[pl.ds(0, 1), :] = z1
    for b in range(tb - 1):
        pad_ref[pl.ds((b + 1) * p - 1, 2), :] = z2
    pad_ref[pl.ds(tb * p - 1, 1), :] = z1


def _make_kernel(TB, L):
    n1, n2 = L // 2, L // 4
    P2, P3 = n1 + 2, n2 + 2                 # per-sample padded lengths
    M2, M3 = TB * P2 - 2, TB * P3 - 2       # flat conv2 / conv3 output rows
    M2h, M3h = M2 // 2, M3 // 2
    h2 = P2 // 2

    def kernel(x_ref, w1_ref, s1_ref, t1_ref, w2_ref, s2_ref, t2_ref,
               w3_ref, s3_ref, t3_ref, savg_ref, fw1_ref, fb1_ref,
               fw2_ref, fb2_ref, out_ref, tmp1, pad2, tmp2, pad3, tmp3):
        # ---- stage 1: conv1 (k=5, pad=2) as ONE im2col matmul + bn1 + relu.
        # x_ref is the host-built bf16 im2col block (TB*L rows, 60 lanes).
        tmp1[...] = jnp.maximum(
            jnp.dot(x_ref[...], w1_ref[...],
                    preferred_element_type=jnp.float32)
            * s1_ref[...] + t1_ref[...], 0.0)

        # ---- pool1: one global stride-2 pairwise max, then TB contiguous
        # row-range copies into pad2's per-sample interiors.
        pooled1 = jnp.maximum(tmp1[pl.ds(0, TB * n1, stride=2), :],
                              tmp1[pl.ds(1, TB * n1, stride=2), :])
        for b in range(TB):
            pad2[pl.ds(b * P2 + 1, n1), :] = pooled1[b * n1:(b + 1) * n1, :]
        _zero_halos(pad2, TB, P2, 32)

        # ---- stage 2: conv2 (k=3, pad=1) + bn2 + relu ----
        tmp2[...] = _conv_bn_relu(pad2, w2_ref, s2_ref, t2_ref, M2)

        # ---- pool2 -> pad3 ----
        pooled2 = jnp.maximum(tmp2[pl.ds(0, M2h, stride=2), :],
                              tmp2[pl.ds(1, M2h, stride=2), :])
        for b in range(TB):
            pad3[pl.ds(b * P3 + 1, n2), :] = pooled2[b * h2: b * h2 + n2, :]
        _zero_halos(pad3, TB, P3, 64)

        # ---- stage 3: conv3 (k=3, pad=1) + bn3 + relu ----
        tmp3[...] = _conv_bn_relu(pad3, w3_ref, s3_ref, t3_ref, M3)

        # ---- pool3 + AdaptiveAvgPool1d(1): one global pairwise max, then a
        # bf16 (TB, M3h) @ (M3h, 128) matmul with the constant per-sample
        # averaging matrix (zeros on inter-sample junk rows).
        pooled3 = jnp.maximum(tmp3[pl.ds(0, M3h, stride=2), :],
                              tmp3[pl.ds(1, M3h, stride=2), :])
        g = jnp.dot(savg_ref[...], pooled3.astype(jnp.bfloat16),
                    preferred_element_type=jnp.float32)

        # ---- fc1 + relu + fc2 (fc2 zero-padded to 128 output lanes) ----
        h = jnp.maximum(
            jnp.dot(g.astype(jnp.bfloat16), fw1_ref[...],
                    preferred_element_type=jnp.float32) + fb1_ref[...], 0.0)
        # TODO(synk): nn.Dropout(0.5) is identity in eval mode; no RNG dropout.
        out = (jnp.dot(h.astype(jnp.bfloat16), fw2_ref[...],
                       preferred_element_type=jnp.float32) + fb2_ref[...])
        out_ref[...] = out.astype(out_ref.dtype)

    return kernel


def _vmem_budget():
    """Generation-aware VMEM budget: scoped limit ~3/4 of physical VMEM
    (96 MiB cap), tiling budget ~65% of the limit.  Falls back to a
    conservative 64 MiB physical assumption if the query fails."""
    cap = 64 * 1024 * 1024
    try:
        cap = int(getattr(pltpu.get_tpu_info(), "vmem_capacity_bytes", cap))
    except Exception:
        pass
    limit = min((cap * 3) // 4, 96 * 1024 * 1024)
    return (limit * 13) // 20, limit


def _vmem_estimate(TB, L):
    """Rough per-step VMEM footprint (<=128-lane buffers pad to 128 lanes)."""
    P2, P3 = L // 2 + 2, L // 4 + 2
    M2, M3 = TB * P2 - 2, TB * P3 - 2
    r8 = lambda r: -(-r // 8) * 8
    lanes = 128
    scratch = 4 * lanes * (r8(TB * L) + r8(TB * P2) + r8(M2)
                           + r8(TB * P3) + r8(M3))              # f32 scratch
    io = 2 * TB * L * lanes * 2 + 2 * TB * lanes * 4            # bf16 in, f32 out (dbl-buf)
    savg = 2 * 16 * (-(-(M3 // 2) // 128) * 128) * 2            # bf16 avg matrix (dbl-buf)
    temps = 4 * lanes * (r8(TB * L) + r8(M3 // 2))              # slice / pooled temporaries
    return scratch + io + savg + temps + (2 << 20)              # + params & headroom


def _pick_tb(B, L, budget_bytes):
    """Batch tile: amortize per-step overhead, keep >=2 grid steps (v7x has
    2 TensorCores sharded via dimension_semantics=('parallel',)), and stay
    inside the generation-aware VMEM budget."""
    if B >= 32:
        tb = 16
    elif B >= 16:
        tb = 8
    elif B >= 2:
        tb = max(1, B // 2)
    else:
        tb = 1
    while tb > 1 and _vmem_estimate(tb, L) > budget_bytes:
        tb -= 1
    return tb


def ecg_cnn_forward(x_ncl, params):
    """x_ncl: (B, 12, L) float32, PyTorch NCL layout.  Returns (B, 2) float32."""
    B, c_in, L = x_ncl.shape
    assert c_in == 12 and L % 8 == 0, "expects 12 leads and L % 8 == 0"

    budget, vmem_limit = _vmem_budget()
    TB = _pick_tb(B, L, budget)
    G = -(-B // TB)                       # ceil(B / TB) grid steps
    Bp = G * TB
    n1, n2, n_avg = L // 2, L // 4, L // 8
    P2, P3 = n1 + 2, n2 + 2
    M2, M3 = TB * P2 - 2, TB * P3 - 2
    M3h = M3 // 2

    # NCL -> (B, L, C); pad batch; host-side im2col for conv1 (k=5, pad=2):
    # lane k*12+c of row (b, t) holds x_zeropadded[b, t+k, c].  bf16 input.
    x_blc = jnp.transpose(x_ncl, (0, 2, 1))
    x_pad = jnp.pad(x_blc, ((0, Bp - B), (2, 2), (0, 0)))
    x_im2col = jnp.concatenate([x_pad[:, k:k + L, :] for k in range(5)], axis=-1)
    x_in = x_im2col.astype(jnp.bfloat16).reshape(G, TB * L, 60)

    def fold_bn(conv_b, gamma, beta, mean, var):
        scale = gamma / jnp.sqrt(var + BN_EPS)
        shift = beta + scale * (conv_b - mean)
        return (scale.reshape(1, -1).astype(jnp.float32),
                shift.reshape(1, -1).astype(jnp.float32))

    w1, b1 = params['conv1']
    w2, b2 = params['conv2']
    w3, b3 = params['conv3']
    s1, t1 = fold_bn(b1, *params['bn1'])
    s2, t2 = fold_bn(b2, *params['bn2'])
    s3, t3 = fold_bn(b3, *params['bn3'])
    # conv1 (Cout,Cin,K) -> im2col matrix (K*Cin, Cout); conv2/3 -> (K,Cin,Cout).
    w1m = jnp.transpose(w1, (2, 1, 0)).reshape(5 * 12, 32).astype(jnp.bfloat16)
    w2t = jnp.transpose(w2, (2, 1, 0)).astype(jnp.bfloat16)
    w3t = jnp.transpose(w3, (2, 1, 0)).astype(jnp.bfloat16)

    fw1, fb1 = params['fc1']
    fw2, fb2 = params['fc2']
    fw1t = fw1.T.astype(jnp.bfloat16)                     # (128, 128)
    fb1r = fb1.reshape(1, -1).astype(jnp.float32)         # (1, 128)
    # fc2 zero-padded to 128 output lanes -> lane-dense unmasked output store.
    fw2p = jnp.zeros((128, 128), jnp.float32).at[:, :2].set(fw2.T).astype(jnp.bfloat16)
    fb2p = jnp.zeros((1, 128), jnp.float32).at[0, :2].set(fb2)

    # Constant per-sample averaging matrix for pool3 + AdaptiveAvgPool1d(1):
    # row b selects sample b's L//8 valid pooled rows and scales by 1/(L//8).
    savg_np = np.zeros((TB, M3h), np.float32)
    half_p3 = P3 // 2
    for b in range(TB):
        savg_np[b, b * half_p3: b * half_p3 + n_avg] = 1.0 / n_avg
    savg = jnp.asarray(savg_np).astype(jnp.bfloat16)

    param_args = [w1m, s1, t1, w2t, s2, t2, w3t, s3, t3, savg,
                  fw1t, fb1r, fw2p, fb2p]

    in_specs = [pl.BlockSpec((None, TB * L, 60), lambda i: (i, 0, 0))]
    for p in param_args:
        in_specs.append(
            pl.BlockSpec(p.shape, (lambda nd: (lambda i: (0,) * nd))(p.ndim)))

    out = pl.pallas_call(
        _make_kernel(TB, L),
        out_shape=jax.ShapeDtypeStruct((G, TB, 128), jnp.float32),
        grid=(G,),
        in_specs=in_specs,
        out_specs=pl.BlockSpec((None, TB, 128), lambda i: (i, 0, 0)),
        scratch_shapes=[
            pltpu.VMEM((TB * L, 32), jnp.float32),    # conv1+bn1+relu (flat, no halos)
            pltpu.VMEM((TB * P2, 32), jnp.float32),   # pool1 out w/ conv2 halos
            pltpu.VMEM((M2, 64), jnp.float32),        # conv2+bn2+relu
            pltpu.VMEM((TB * P3, 64), jnp.float32),   # pool2 out w/ conv3 halos
            pltpu.VMEM((M3, 128), jnp.float32),       # conv3+bn3+relu
        ],
        compiler_params=pltpu.CompilerParams(
            dimension_semantics=("parallel",),
            vmem_limit_bytes=vmem_limit),
    )(x_in, *param_args)
    return out.reshape(Bp, 128)[:B, :2]


# -------------------- deterministic parameter init (mirrors __init__) ---------
def init_params(key):
    ks = jax.random.split(key, 5)

    def conv_init(k, co, ci, ksz):
        bound = 1.0 / np.sqrt(ci * ksz)
        kw, kb = jax.random.split(k)
        w = jax.random.uniform(kw, (co, ci, ksz), jnp.float32, -bound, bound)
        b = jax.random.uniform(kb, (co,), jnp.float32, -bound, bound)
        return w, b

    def linear_init(k, out_f, in_f):
        bound = 1.0 / np.sqrt(in_f)
        kw, kb = jax.random.split(k)
        w = jax.random.uniform(kw, (out_f, in_f), jnp.float32, -bound, bound)
        b = jax.random.uniform(kb, (out_f,), jnp.float32, -bound, bound)
        return w, b

    def bn_init(c):   # gamma, beta, running_mean, running_var (PyTorch defaults)
        return (jnp.ones((c,), jnp.float32), jnp.zeros((c,), jnp.float32),
                jnp.zeros((c,), jnp.float32), jnp.ones((c,), jnp.float32))

    return {
        'conv1': conv_init(ks[0], 32, 12, 5), 'bn1': bn_init(32),
        'conv2': conv_init(ks[1], 64, 32, 3), 'bn2': bn_init(64),
        'conv3': conv_init(ks[2], 128, 64, 3), 'bn3': bn_init(128),
        'fc1': linear_init(ks[3], 128, 128),
        'fc2': linear_init(ks[4], 2, 128),
    }


# -------------------- pure-JAX reference (PyTorch semantics, eval mode) -------
def reference_forward(x, params):
    def conv1d(x, w, b, pad):
        B, ci, L = x.shape
        co, _, K = w.shape
        xp = jnp.pad(x, ((0, 0), (0, 0), (pad, pad)))
        y = jnp.zeros((B, co, L), jnp.float32)
        for k in range(K):
            y = y + jnp.einsum('bcl,oc->bol', xp[:, :, k:k + L], w[:, :, k])
        return y + b[None, :, None]

    def bn(x, gamma, beta, mean, var):
        inv = gamma / jnp.sqrt(var + BN_EPS)
        return (x - mean[None, :, None]) * inv[None, :, None] + beta[None, :, None]

    def pool(x):
        B, C, L = x.shape
        return jnp.max(x.reshape(B, C, L // 2, 2), axis=-1)

    h = pool(jax.nn.relu(bn(conv1d(x, *params['conv1'], 2), *params['bn1'])))
    h = pool(jax.nn.relu(bn(conv1d(h, *params['conv2'], 1), *params['bn2'])))
    h = pool(jax.nn.relu(bn(conv1d(h, *params['conv3'], 1), *params['bn3'])))
    g = jnp.mean(h, axis=-1)                       # AdaptiveAvgPool1d(1) + flatten
    fw1, fb1 = params['fc1']
    fw2, fb2 = params['fc2']
    h = jax.nn.relu(g @ fw1.T + fb1)               # dropout = identity (eval)
    return h @ fw2.T + fb2


if __name__ == "__main__":
    key = jax.random.PRNGKey(0)
    kp, kx = jax.random.split(key)
    params = init_params(kp)

    B, L = 8, 32                                    # small demo shapes (12 leads)
    x = jax.random.normal(kx, (B, 12, L), jnp.float32)   # PyTorch NCL input

    y = jax.block_until_ready(ecg_cnn_forward(x, params))
    y_ref = jax.block_until_ready(reference_forward(x, params))

    assert y.shape == (B, 2), y.shape
    # Intentional precision tradeoff: conv / avg-pool / fc matmuls run on the
    # bf16 MXU path (f32 accumulation) -> relaxed tolerance vs. the f32 ref.
    if not np.allclose(np.asarray(y), np.asarray(y_ref), rtol=3e-2, atol=3e-2):
        raise AssertionError(
            f"mismatch:\npallas={np.asarray(y)}\nref={np.asarray(y_ref)}")
    print("KERNEL_OK")
</pallas_src>

<mosaic_0001>
module attributes {stable_mosaic.version = 11 : i64} {
  func.func @kernel(%arg0: i32, %arg1: memref<1x128x60xbf16, #tpu.memory_space<vmem>>, %arg2: memref<60x32xbf16, #tpu.memory_space<vmem>>, %arg3: memref<1x32xf32, #tpu.memory_space<vmem>>, %arg4: memref<1x32xf32, #tpu.memory_space<vmem>>, %arg5: memref<3x32x64xbf16, #tpu.memory_space<vmem>>, %arg6: memref<1x64xf32, #tpu.memory_space<vmem>>, %arg7: memref<1x64xf32, #tpu.memory_space<vmem>>, %arg8: memref<3x64x128xbf16, #tpu.memory_space<vmem>>, %arg9: memref<1x128xf32, #tpu.memory_space<vmem>>, %arg10: memref<1x128xf32, #tpu.memory_space<vmem>>, %arg11: memref<4x19xbf16, #tpu.memory_space<vmem>>, %arg12: memref<128x128xbf16, #tpu.memory_space<vmem>>, %arg13: memref<1x128xf32, #tpu.memory_space<vmem>>, %arg14: memref<128x128xbf16, #tpu.memory_space<vmem>>, %arg15: memref<1x128xf32, #tpu.memory_space<vmem>>, %arg16: memref<1x4x128xf32, #tpu.memory_space<vmem>>, %arg17: memref<128x32xf32, #tpu.memory_space<vmem>>, %arg18: memref<72x32xf32, #tpu.memory_space<vmem>>, %arg19: memref<70x64xf32, #tpu.memory_space<vmem>>, %arg20: memref<40x64xf32, #tpu.memory_space<vmem>>, %arg21: memref<38x128xf32, #tpu.memory_space<vmem>>) attributes {dimension_semantics = [#tpu.dimension_semantics<parallel>], iteration_bounds = array<i64: 2>, scalar_prefetch = 0 : i64, scratch_operands = 5 : i64, tpu.core_type = #tpu.core_type<tc>, window_params = [{transform_indices = @transform_0, window_bounds = array<i64: 1, 128, 60>}, {pipeline_mode = #tpu.pipeline_mode<synchronous>, transform_indices = @transform_1, window_bounds = array<i64: 60, 32>}, {pipeline_mode = #tpu.pipeline_mode<synchronous>, transform_indices = @transform_2, window_bounds = array<i64: 1, 32>}, {pipeline_mode = #tpu.pipeline_mode<synchronous>, transform_indices = @transform_3, window_bounds = array<i64: 1, 32>}, {pipeline_mode = #tpu.pipeline_mode<synchronous>, transform_indices = @transform_4, window_bounds = array<i64: 3, 32, 64>}, {pipeline_mode = #tpu.pipeline_mode<synchronous>, transform_indices = @transform_5, window_bounds = array<i64: 1, 64>}, {pipeline_mode = #tpu.pipeline_mode<synchronous>, transform_indices = @transform_6, window_bounds = array<i64: 1, 64>}, {pipeline_mode = #tpu.pipeline_mode<synchronous>, transform_indices = @transform_7, window_bounds = array<i64: 3, 64, 128>}, {pipeline_mode = #tpu.pipeline_mode<synchronous>, transform_indices = @transform_8, window_bounds = array<i64: 1, 128>}, {pipeline_mode = #tpu.pipeline_mode<synchronous>, transform_indices = @transform_9, window_bounds = array<i64: 1, 128>}, {pipeline_mode = #tpu.pipeline_mode<synchronous>, transform_indices = @transform_10, window_bounds = array<i64: 4, 19>}, {pipeline_mode = #tpu.pipeline_mode<synchronous>, transform_indices = @transform_11, window_bounds = array<i64: 128, 128>}, {pipeline_mode = #tpu.pipeline_mode<synchronous>, transform_indices = @transform_12, window_bounds = array<i64: 1, 128>}, {pipeline_mode = #tpu.pipeline_mode<synchronous>, transform_indices = @transform_13, window_bounds = array<i64: 128, 128>}, {pipeline_mode = #tpu.pipeline_mode<synchronous>, transform_indices = @transform_14, window_bounds = array<i64: 1, 128>}, {transform_indices = @transform_15, window_bounds = array<i64: 1, 4, 128>}]} {
    %c0 = arith.constant 0 : index
    %c0_0 = arith.constant 0 : index
    %c0_1 = arith.constant 0 : index
    %0 = vector.load %arg1[%c0, %c0_0, %c0_1] : memref<1x128x60xbf16, #tpu.memory_space<vmem>>, vector<1x128x60xbf16>
    %1 = vector.shape_cast %0 : vector<1x128x60xbf16> to vector<128x60xbf16>
    %c0_2 = arith.constant 0 : index
    %c0_3 = arith.constant 0 : index
    %2 = vector.load %arg2[%c0_2, %c0_3] : memref<60x32xbf16, #tpu.memory_space<vmem>>, vector<60x32xbf16>
    %cst = arith.constant dense<0.000000e+00> : vector<128x32xf32>
    %3 = tpu.matmul %1, %2, %cst {dimension_numbers = #tpu.dot_dimension_numbers<[1], [0], [0], [1], [0, 0, 1, 1], [], []>} : vector<128x60xbf16>, vector<60x32xbf16>, vector<128x32xf32> -> vector<128x32xf32>
    %c0_4 = arith.constant 0 : index
    %c0_5 = arith.constant 0 : index
    %4 = vector.load %arg3[%c0_4, %c0_5] : memref<1x32xf32, #tpu.memory_space<vmem>>, vector<1x32xf32>
    %5 = vector.broadcast %4 : vector<1x32xf32> to vector<128x32xf32>
    %6 = arith.mulf %3, %5 : vector<128x32xf32>
    %c0_6 = arith.constant 0 : index
    %c0_7 = arith.constant 0 : index
    %7 = vector.load %arg4[%c0_6, %c0_7] : memref<1x32xf32, #tpu.memory_space<vmem>>, vector<1x32xf32>
    %8 = vector.broadcast %7 : vector<1x32xf32> to vector<128x32xf32>
    %9 = arith.addf %6, %8 : vector<128x32xf32>
    %cst_8 = arith.constant 0.000000e+00 : f32
    %10 = vector.broadcast %cst_8 : f32 to vector<128x32xf32>
    %11 = arith.maximumf %9, %10 : vector<128x32xf32>
    %c0_9 = arith.constant 0 : index
    %c0_10 = arith.constant 0 : index
    %12 = vector.load %arg17[%c0_9, %c0_10] : memref<128x32xf32, #tpu.memory_space<vmem>>, vector<128x32xf32>
    tpu.vector_store %arg17[%c0_9, %c0_10], %11 {strides = array<i32>} : memref<128x32xf32, #tpu.memory_space<vmem>>, vector<128x32xf32>,
    %c0_11 = arith.constant 0 : index
    %c0_12 = arith.constant 0 : index
    %13 = tpu.strided_load %arg17[%c0_11, %c0_12] {strides = array<i32: 2, 1>} : memref<128x32xf32, #tpu.memory_space<vmem>>, vector<64x32xf32>
    %c1 = arith.constant 1 : index
    %c0_13 = arith.constant 0 : index
    %14 = tpu.strided_load %arg17[%c1, %c0_13] {strides = array<i32: 2, 1>} : memref<128x32xf32, #tpu.memory_space<vmem>>, vector<64x32xf32>
    %15 = arith.maximumf %13, %14 : vector<64x32xf32>
    %16 = vector.extract_strided_slice %15 {offsets = [0, 0], sizes = [16, 32], strides = [1, 1]} : vector<64x32xf32> to vector<16x32xf32>
    %c1_14 = arith.constant 1 : index
    %c0_15 = arith.constant 0 : index
    %17 = vector.load %arg18[%c1_14, %c0_15] : memref<72x32xf32, #tpu.memory_space<vmem>>, vector<16x32xf32>
    tpu.vector_store %arg18[%c1_14, %c0_15], %16 {strides = array<i32>} : memref<72x32xf32, #tpu.memory_space<vmem>>, vector<16x32xf32>,
    %18 = vector.extract_strided_slice %15 {offsets = [16, 0], sizes = [16, 32], strides = [1, 1]} : vector<64x32xf32> to vector<16x32xf32>
    %c19 = arith.constant 19 : index
    %c0_16 = arith.constant 0 : index
    %19 = vector.load %arg18[%c19, %c0_16] : memref<72x32xf32, #tpu.memory_space<vmem>>, vector<16x32xf32>
    tpu.vector_store %arg18[%c19, %c0_16], %18 {strides = array<i32>} : memref<72x32xf32, #tpu.memory_space<vmem>>, vector<16x32xf32>,
    %20 = vector.extract_strided_slice %15 {offsets = [32, 0], sizes = [16, 32], strides = [1, 1]} : vector<64x32xf32> to vector<16x32xf32>
    %c37 = arith.constant 37 : index
    %c0_17 = arith.constant 0 : index
    %21 = vector.load %arg18[%c37, %c0_17] : memref<72x32xf32, #tpu.memory_space<vmem>>, vector<16x32xf32>
    tpu.vector_store %arg18[%c37, %c0_17], %20 {strides = array<i32>} : memref<72x32xf32, #tpu.memory_space<vmem>>, vector<16x32xf32>,
    %22 = vector.extract_strided_slice %15 {offsets = [48, 0], sizes = [16, 32], strides = [1, 1]} : vector<64x32xf32> to vector<16x32xf32>
    %c55 = arith.constant 55 : index
    %c0_18 = arith.constant 0 : index
    %23 = vector.load %arg18[%c55, %c0_18] : memref<72x32xf32, #tpu.memory_space<vmem>>, vector<16x32xf32>
    tpu.vector_store %arg18[%c55, %c0_18], %22 {strides = array<i32>} : memref<72x32xf32, #tpu.memory_space<vmem>>, vector<16x32xf32>,
    %cst_19 = arith.constant 0.000000e+00 : f32
    %24 = vector.broadcast %cst_19 : f32 to vector<1x32xf32>
    %cst_20 = arith.constant 0.000000e+00 : f32
    %25 = vector.broadcast %cst_20 : f32 to vector<2x32xf32>
    %c0_21 = arith.constant 0 : index
    %c0_22 = arith.constant 0 : index
    %26 = vector.load %arg18[%c0_21, %c0_22] : memref<72x32xf32, #tpu.memory_space<vmem>>, vector<1x32xf32>
    tpu.vector_store %arg18[%c0_21, %c0_22], %24 {strides = array<i32>} : memref<72x32xf32, #tpu.memory_space<vmem>>, vector<1x32xf32>,
    %c17 = arith.constant 17 : index
    %c0_23 = arith.constant 0 : index
    %27 = vector.load %arg18[%c17, %c0_23] : memref<72x32xf32, #tpu.memory_space<vmem>>, vector<2x32xf32>
    tpu.vector_store %arg18[%c17, %c0_23], %25 {strides = array<i32>} : memref<72x32xf32, #tpu.memory_space<vmem>>, vector<2x32xf32>,
    %c35 = arith.constant 35 : index
    %c0_24 = arith.constant 0 : index
    %28 = vector.load %arg18[%c35, %c0_24] : memref<72x32xf32, #tpu.memory_space<vmem>>, vector<2x32xf32>
    tpu.vector_store %arg18[%c35, %c0_24], %25 {strides = array<i32>} : memref<72x32xf32, #tpu.memory_space<vmem>>, vector<2x32xf32>,
    %c53 = arith.constant 53 : index
    %c0_25 = arith.constant 0 : index
    %29 = vector.load %arg18[%c53, %c0_25] : memref<72x32xf32, #tpu.memory_space<vmem>>, vector<2x32xf32>
    tpu.vector_store %arg18[%c53, %c0_25], %25 {strides = array<i32>} : memref<72x32xf32, #tpu.memory_space<vmem>>, vector<2x32xf32>,
    %c71 = arith.constant 71 : index
    %c0_26 = arith.constant 0 : index
    %30 = vector.load %arg18[%c71, %c0_26] : memref<72x32xf32, #tpu.memory_space<vmem>>, vector<1x32xf32>
    tpu.vector_store %arg18[%c71, %c0_26], %24 {strides = array<i32>} : memref<72x32xf32, #tpu.memory_space<vmem>>, vector<1x32xf32>,
    %c0_27 = arith.constant 0 : index
    %c0_28 = arith.constant 0 : index
    %31 = vector.load %arg18[%c0_27, %c0_28] : memref<72x32xf32, #tpu.memory_space<vmem>>, vector<70x32xf32>
    %32 = arith.truncf %31 : vector<70x32xf32> to vector<70x32xbf16>
    %c0_29 = arith.constant 0 : index
    %c0_30 = arith.constant 0 : index
    %c0_31 = arith.constant 0 : index
    %33 = vector.load %arg5[%c0_29, %c0_30, %c0_31] : memref<3x32x64xbf16, #tpu.memory_space<vmem>>, vector<1x32x64xbf16>
    %34 = vector.shape_cast %33 : vector<1x32x64xbf16> to vector<32x64xbf16>
    %cst_32 = arith.constant dense<0.000000e+00> : vector<70x64xf32>
    %35 = tpu.matmul %32, %34, %cst_32 {dimension_numbers = #tpu.dot_dimension_numbers<[1], [0], [0], [1], [0, 0, 1, 1], [], []>} : vector<70x32xbf16>, vector<32x64xbf16>, vector<70x64xf32> -> vector<70x64xf32>
    %c1_33 = arith.constant 1 : index
    %c0_34 = arith.constant 0 : index
    %36 = vector.load %arg18[%c1_33, %c0_34] : memref<72x32xf32, #tpu.memory_space<vmem>>, vector<70x32xf32>
    %37 = arith.truncf %36 : vector<70x32xf32> to vector<70x32xbf16>
    %c1_35 = arith.constant 1 : index
    %c0_36 = arith.constant 0 : index
    %c0_37 = arith.constant 0 : index
    %38 = vector.load %arg5[%c1_35, %c0_36, %c0_37] : memref<3x32x64xbf16, #tpu.memory_space<vmem>>, vector<1x32x64xbf16>
    %39 = vector.shape_cast %38 : vector<1x32x64xbf16> to vector<32x64xbf16>
    %cst_38 = arith.constant dense<0.000000e+00> : vector<70x64xf32>
    %40 = tpu.matmul %37, %39, %cst_38 {dimension_numbers = #tpu.dot_dimension_numbers<[1], [0], [0], [1], [0, 0, 1, 1], [], []>} : vector<70x32xbf16>, vector<32x64xbf16>, vector<70x64xf32> -> vector<70x64xf32>
    %41 = arith.addf %35, %40 : vector<70x64xf32>
    %c2 = arith.constant 2 : index
    %c0_39 = arith.constant 0 : index
    %42 = vector.load %arg18[%c2, %c0_39] : memref<72x32xf32, #tpu.memory_space<vmem>>, vector<70x32xf32>
    %43 = arith.truncf %42 : vector<70x32xf32> to vector<70x32xbf16>
    %c2_40 = arith.constant 2 : index
    %c0_41 = arith.constant 0 : index
    %c0_42 = arith.constant 0 : index
    %44 = vector.load %arg5[%c2_40, %c0_41, %c0_42] : memref<3x32x64xbf16, #tpu.memory_space<vmem>>, vector<1x32x64xbf16>
    %45 = vector.shape_cast %44 : vector<1x32x64xbf16> to vector<32x64xbf16>
    %cst_43 = arith.constant dense<0.000000e+00> : vector<70x64xf32>
    %46 = tpu.matmul %43, %45, %cst_43 {dimension_numbers = #tpu.dot_dimension_numbers<[1], [0], [0], [1], [0, 0, 1, 1], [], []>} : vector<70x32xbf16>, vector<32x64xbf16>, vector<70x64xf32> -> vector<70x64xf32>
    %47 = arith.addf %41, %46 : vector<70x64xf32>
    %c0_44 = arith.constant 0 : index
    %c0_45 = arith.constant 0 : index
    %48 = vector.load %arg6[%c0_44, %c0_45] : memref<1x64xf32, #tpu.memory_space<vmem>>, vector<1x64xf32>
    %49 = vector.broadcast %48 : vector<1x64xf32> to vector<70x64xf32>
    %50 = arith.mulf %47, %49 : vector<70x64xf32>
    %c0_46 = arith.constant 0 : index
    %c0_47 = arith.constant 0 : index
    %51 = vector.load %arg7[%c0_46, %c0_47] : memref<1x64xf32, #tpu.memory_space<vmem>>, vector<1x64xf32>
    %52 = vector.broadcast %51 : vector<1x64xf32> to vector<70x64xf32>
    %53 = arith.addf %50, %52 : vector<70x64xf32>
    %cst_48 = arith.constant 0.000000e+00 : f32
    %54 = vector.broadcast %cst_48 : f32 to vector<70x64xf32>
    %55 = arith.maximumf %53, %54 : vector<70x64xf32>
    %c0_49 = arith.constant 0 : index
    %c0_50 = arith.constant 0 : index
    %56 = vector.load %arg19[%c0_49, %c0_50] : memref<70x64xf32, #tpu.memory_space<vmem>>, vector<70x64xf32>
    tpu.vector_store %arg19[%c0_49, %c0_50], %55 {strides = array<i32>} : memref<70x64xf32, #tpu.memory_space<vmem>>, vector<70x64xf32>,
    %c0_51 = arith.constant 0 : index
    %c0_52 = arith.constant 0 : index
    %57 = tpu.strided_load %arg19[%c0_51, %c0_52] {strides = array<i32: 2, 1>} : memref<70x64xf32, #tpu.memory_space<vmem>>, vector<35x64xf32>
    %c1_53 = arith.constant 1 : index
    %c0_54 = arith.constant 0 : index
    %58 = tpu.strided_load %arg19[%c1_53, %c0_54] {strides = array<i32: 2, 1>} : memref<70x64xf32, #tpu.memory_space<vmem>>, vector<35x64xf32>
    %59 = arith.maximumf %57, %58 : vector<35x64xf32>
    %60 = vector.extract_strided_slice %59 {offsets = [0, 0], sizes = [8, 64], strides = [1, 1]} : vector<35x64xf32> to vector<8x64xf32>
    %c1_55 = arith.constant 1 : index
    %c0_56 = arith.constant 0 : index
    %61 = vector.load %arg20[%c1_55, %c0_56] : memref<40x64xf32, #tpu.memory_space<vmem>>, vector<8x64xf32>
    tpu.vector_store %arg20[%c1_55, %c0_56], %60 {strides = array<i32>} : memref<40x64xf32, #tpu.memory_space<vmem>>, vector<8x64xf32>,
    %62 = vector.extract_strided_slice %59 {offsets = [9, 0], sizes = [8, 64], strides = [1, 1]} : vector<35x64xf32> to vector<8x64xf32>
    %c11 = arith.constant 11 : index
    %c0_57 = arith.constant 0 : index
    %63 = vector.load %arg20[%c11, %c0_57] : memref<40x64xf32, #tpu.memory_space<vmem>>, vector<8x64xf32>
    tpu.vector_store %arg20[%c11, %c0_57], %62 {strides = array<i32>} : memref<40x64xf32, #tpu.memory_space<vmem>>, vector<8x64xf32>,
    %64 = vector.extract_strided_slice %59 {offsets = [18, 0], sizes = [8, 64], strides = [1, 1]} : vector<35x64xf32> to vector<8x64xf32>
    %c21 = arith.constant 21 : index
    %c0_58 = arith.constant 0 : index
    %65 = vector.load %arg20[%c21, %c0_58] : memref<40x64xf32, #tpu.memory_space<vmem>>, vector<8x64xf32>
    tpu.vector_store %arg20[%c21, %c0_58], %64 {strides = array<i32>} : memref<40x64xf32, #tpu.memory_space<vmem>>, vector<8x64xf32>,
    %66 = vector.extract_strided_slice %59 {offsets = [27, 0], sizes = [8, 64], strides = [1, 1]} : vector<35x64xf32> to vector<8x64xf32>
    %c31 = arith.constant 31 : index
    %c0_59 = arith.constant 0 : index
    %67 = vector.load %arg20[%c31, %c0_59] : memref<40x64xf32, #tpu.memory_space<vmem>>, vector<8x64xf32>
    tpu.vector_store %arg20[%c31, %c0_59], %66 {strides = array<i32>} : memref<40x64xf32, #tpu.memory_space<vmem>>, vector<8x64xf32>,
    %cst_60 = arith.constant 0.000000e+00 : f32
    %68 = vector.broadcast %cst_60 : f32 to vector<1x64xf32>
    %cst_61 = arith.constant 0.000000e+00 : f32
    %69 = vector.broadcast %cst_61 : f32 to vector<2x64xf32>
    %c0_62 = arith.constant 0 : index
    %c0_63 = arith.constant 0 : index
    %70 = vector.load %arg20[%c0_62, %c0_63] : memref<40x64xf32, #tpu.memory_space<vmem>>, vector<1x64xf32>
    tpu.vector_store %arg20[%c0_62, %c0_63], %68 {strides = array<i32>} : memref<40x64xf32, #tpu.memory_space<vmem>>, vector<1x64xf32>,
    %c9 = arith.constant 9 : index
    %c0_64 = arith.constant 0 : index
    %71 = vector.load %arg20[%c9, %c0_64] : memref<40x64xf32, #tpu.memory_space<vmem>>, vector<2x64xf32>
    tpu.vector_store %arg20[%c9, %c0_64], %69 {strides = array<i32>} : memref<40x64xf32, #tpu.memory_space<vmem>>, vector<2x64xf32>,
    %c19_65 = arith.constant 19 : index
    %c0_66 = arith.constant 0 : index
    %72 = vector.load %arg20[%c19_65, %c0_66] : memref<40x64xf32, #tpu.memory_space<vmem>>, vector<2x64xf32>
    tpu.vector_store %arg20[%c19_65, %c0_66], %69 {strides = array<i32>} : memref<40x64xf32, #tpu.memory_space<vmem>>, vector<2x64xf32>,
    %c29 = arith.constant 29 : index
    %c0_67 = arith.constant 0 : index
    %73 = vector.load %arg20[%c29, %c0_67] : memref<40x64xf32, #tpu.memory_space<vmem>>, vector<2x64xf32>
    tpu.vector_store %arg20[%c29, %c0_67], %69 {strides = array<i32>} : memref<40x64xf32, #tpu.memory_space<vmem>>, vector<2x64xf32>,
    %c39 = arith.constant 39 : index
    %c0_68 = arith.constant 0 : index
    %74 = vector.load %arg20[%c39, %c0_68] : memref<40x64xf32, #tpu.memory_space<vmem>>, vector<1x64xf32>
    tpu.vector_store %arg20[%c39, %c0_68], %68 {strides = array<i32>} : memref<40x64xf32, #tpu.memory_space<vmem>>, vector<1x64xf32>,
    %c0_69 = arith.constant 0 : index
    %c0_70 = arith.constant 0 : index
    %75 = vector.load %arg20[%c0_69, %c0_70] : memref<40x64xf32, #tpu.memory_space<vmem>>, vector<38x64xf32>
    %76 = arith.truncf %75 : vector<38x64xf32> to vector<38x64xbf16>
    %c0_71 = arith.constant 0 : index
    %c0_72 = arith.constant 0 : index
    %c0_73 = arith.constant 0 : index
    %77 = vector.load %arg8[%c0_71, %c0_72, %c0_73] : memref<3x64x128xbf16, #tpu.memory_space<vmem>>, vector<1x64x128xbf16>
    %78 = vector.shape_cast %77 : vector<1x64x128xbf16> to vector<64x128xbf16>
    %cst_74 = arith.constant dense<0.000000e+00> : vector<38x128xf32>
    %79 = tpu.matmul %76, %78, %cst_74 {dimension_numbers = #tpu.dot_dimension_numbers<[1], [0], [0], [1], [0, 0, 1, 1], [], []>} : vector<38x64xbf16>, vector<64x128xbf16>, vector<38x128xf32> -> vector<38x128xf32>
    %c1_75 = arith.constant 1 : index
    %c0_76 = arith.constant 0 : index
    %80 = vector.load %arg20[%c1_75, %c0_76] : memref<40x64xf32, #tpu.memory_space<vmem>>, vector<38x64xf32>
    %81 = arith.truncf %80 : vector<38x64xf32> to vector<38x64xbf16>
    %c1_77 = arith.constant 1 : index
    %c0_78 = arith.constant 0 : index
    %c0_79 = arith.constant 0 : index
    %82 = vector.load %arg8[%c1_77, %c0_78, %c0_79] : memref<3x64x128xbf16, #tpu.memory_space<vmem>>, vector<1x64x128xbf16>
    %83 = vector.shape_cast %82 : vector<1x64x128xbf16> to vector<64x128xbf16>
    %cst_80 = arith.constant dense<0.000000e+00> : vector<38x128xf32>
    %84 = tpu.matmul %81, %83, %cst_80 {dimension_numbers = #tpu.dot_dimension_numbers<[1], [0], [0], [1], [0, 0, 1, 1], [], []>} : vector<38x64xbf16>, vector<64x128xbf16>, vector<38x128xf32> -> vector<38x128xf32>
    %85 = arith.addf %79, %84 : vector<38x128xf32>
    %c2_81 = arith.constant 2 : index
    %c0_82 = arith.constant 0 : index
    %86 = vector.load %arg20[%c2_81, %c0_82] : memref<40x64xf32, #tpu.memory_space<vmem>>, vector<38x64xf32>
    %87 = arith.truncf %86 : vector<38x64xf32> to vector<38x64xbf16>
    %c2_83 = arith.constant 2 : index
    %c0_84 = arith.constant 0 : index
    %c0_85 = arith.constant 0 : index
    %88 = vector.load %arg8[%c2_83, %c0_84, %c0_85] : memref<3x64x128xbf16, #tpu.memory_space<vmem>>, vector<1x64x128xbf16>
    %89 = vector.shape_cast %88 : vector<1x64x128xbf16> to vector<64x128xbf16>
    %cst_86 = arith.constant dense<0.000000e+00> : vector<38x128xf32>
    %90 = tpu.matmul %87, %89, %cst_86 {dimension_numbers = #tpu.dot_dimension_numbers<[1], [0], [0], [1], [0, 0, 1, 1], [], []>} : vector<38x64xbf16>, vector<64x128xbf16>, vector<38x128xf32> -> vector<38x128xf32>
    %91 = arith.addf %85, %90 : vector<38x128xf32>
    %c0_87 = arith.constant 0 : index
    %c0_88 = arith.constant 0 : index
    %92 = vector.load %arg9[%c0_87, %c0_88] : memref<1x128xf32, #tpu.memory_space<vmem>>, vector<1x128xf32>
    %93 = vector.broadcast %92 : vector<1x128xf32> to vector<38x128xf32>
    %94 = arith.mulf %91, %93 : vector<38x128xf32>
    %c0_89 = arith.constant 0 : index
    %c0_90 = arith.constant 0 : index
    %95 = vector.load %arg10[%c0_89, %c0_90] : memref<1x128xf32, #tpu.memory_space<vmem>>, vector<1x128xf32>
    %96 = vector.broadcast %95 : vector<1x128xf32> to vector<38x128xf32>
    %97 = arith.addf %94, %96 : vector<38x128xf32>
    %cst_91 = arith.constant 0.000000e+00 : f32
    %98 = vector.broadcast %cst_91 : f32 to vector<38x128xf32>
    %99 = arith.maximumf %97, %98 : vector<38x128xf32>
    %c0_92 = arith.constant 0 : index
    %c0_93 = arith.constant 0 : index
    %100 = vector.load %arg21[%c0_92, %c0_93] : memref<38x128xf32, #tpu.memory_space<vmem>>, vector<38x128xf32>
    tpu.vector_store %arg21[%c0_92, %c0_93], %99 {strides = array<i32>} : memref<38x128xf32, #tpu.memory_space<vmem>>, vector<38x128xf32>,
    %c0_94 = arith.constant 0 : index
    %c0_95 = arith.constant 0 : index
    %101 = tpu.strided_load %arg21[%c0_94, %c0_95] {strides = array<i32: 2, 1>} : memref<38x128xf32, #tpu.memory_space<vmem>>, vector<19x128xf32>
    %c1_96 = arith.constant 1 : index
    %c0_97 = arith.constant 0 : index
    %102 = tpu.strided_load %arg21[%c1_96, %c0_97] {strides = array<i32: 2, 1>} : memref<38x128xf32, #tpu.memory_space<vmem>>, vector<19x128xf32>
    %103 = arith.maximumf %101, %102 : vector<19x128xf32>
    %c0_98 = arith.constant 0 : index
    %c0_99 = arith.constant 0 : index
    %104 = vector.load %arg11[%c0_98, %c0_99] : memref<4x19xbf16, #tpu.memory_space<vmem>>, vector<4x19xbf16>
    %105 = arith.truncf %103 : vector<19x128xf32> to vector<19x128xbf16>
    %cst_100 = arith.constant dense<0.000000e+00> : vector<4x128xf32>
    %106 = tpu.matmul %104, %105, %cst_100 {dimension_numbers = #tpu.dot_dimension_numbers<[1], [0], [0], [1], [0, 0, 1, 1], [], []>} : vector<4x19xbf16>, vector<19x128xbf16>, vector<4x128xf32> -> vector<4x128xf32>
    %107 = arith.truncf %106 : vector<4x128xf32> to vector<4x128xbf16>
    %c0_101 = arith.constant 0 : index
    %c0_102 = arith.constant 0 : index
    %108 = vector.load %arg12[%c0_101, %c0_102] : memref<128x128xbf16, #tpu.memory_space<vmem>>, vector<128x128xbf16>
    %cst_103 = arith.constant dense<0.000000e+00> : vector<4x128xf32>
    %109 = tpu.matmul %107, %108, %cst_103 {dimension_numbers = #tpu.dot_dimension_numbers<[1], [0], [0], [1], [0, 0, 1, 1], [], []>} : vector<4x128xbf16>, vector<128x128xbf16>, vector<4x128xf32> -> vector<4x128xf32>
    %c0_104 = arith.constant 0 : index
    %c0_105 = arith.constant 0 : index
    %110 = vector.load %arg13[%c0_104, %c0_105] : memref<1x128xf32, #tpu.memory_space<vmem>>, vector<1x128xf32>
    %111 = vector.broadcast %110 : vector<1x128xf32> to vector<4x128xf32>
    %112 = arith.addf %109, %111 : vector<4x128xf32>
    %cst_106 = arith.constant 0.000000e+00 : f32
    %113 = vector.broadcast %cst_106 : f32 to vector<4x128xf32>
    %114 = arith.maximumf %112, %113 : vector<4x128xf32>
    %115 = arith.truncf %114 : vector<4x128xf32> to vector<4x128xbf16>
    %c0_107 = arith.constant 0 : index
    %c0_108 = arith.constant 0 : index
    %116 = vector.load %arg14[%c0_107, %c0_108] : memref<128x128xbf16, #tpu.memory_space<vmem>>, vector<128x128xbf16>
    %cst_109 = arith.constant dense<0.000000e+00> : vector<4x128xf32>
    %117 = tpu.matmul %115, %116, %cst_109 {dimension_numbers = #tpu.dot_dimension_numbers<[1], [0], [0], [1], [0, 0, 1, 1], [], []>} : vector<4x128xbf16>, vector<128x128xbf16>, vector<4x128xf32> -> vector<4x128xf32>
    %c0_110 = arith.constant 0 : index
    %c0_111 = arith.constant 0 : index
    %118 = vector.load %arg15[%c0_110, %c0_111] : memref<1x128xf32, #tpu.memory_space<vmem>>, vector<1x128xf32>
    %119 = vector.broadcast %118 : vector<1x128xf32> to vector<4x128xf32>
    %120 = arith.addf %117, %119 : vector<4x128xf32>
    %c0_112 = arith.constant 0 : index
    %c0_113 = arith.constant 0 : index
    %c0_114 = arith.constant 0 : index
    %121 = vector.load %arg16[%c0_112, %c0_113, %c0_114] : memref<1x4x128xf32, #tpu.memory_space<vmem>>, vector<1x4x128xf32>
    %122 = vector.shape_cast %121 : vector<1x4x128xf32> to vector<4x128xf32>
    %123 = vector.shape_cast %120 : vector<4x128xf32> to vector<1x4x128xf32>
    tpu.vector_store %arg16[%c0_112, %c0_113, %c0_114], %123 {strides = array<i32>} : memref<1x4x128xf32, #tpu.memory_space<vmem>>, vector<1x4x128xf32>,
    return
  }
  func.func @transform_0(%arg0: i32) -> (i32, i32, i32) {
    %c0_i32 = arith.constant 0 : i32
    %c0_i32_0 = arith.constant 0 : i32
    %c0_i32_1 = arith.constant 0 : i32
    return %arg0, %c0_i32, %c0_i32_0 : i32, i32, i32
  }
  func.func @transform_1(%arg0: i32) -> (i32, i32) {
    %c0_i32 = arith.constant 0 : i32
    %c0_i32_0 = arith.constant 0 : i32
    %c0_i32_1 = arith.constant 0 : i32
    return %c0_i32, %c0_i32_0 : i32, i32
  }
  func.func @transform_2(%arg0: i32) -> (i32, i32) {
    %c0_i32 = arith.constant 0 : i32
    %c0_i32_0 = arith.constant 0 : i32
    %c0_i32_1 = arith.constant 0 : i32
    return %c0_i32, %c0_i32_0 : i32, i32
  }
  func.func @transform_3(%arg0: i32) -> (i32, i32) {
    %c0_i32 = arith.constant 0 : i32
    %c0_i32_0 = arith.constant 0 : i32
    %c0_i32_1 = arith.constant 0 : i32
    return %c0_i32, %c0_i32_0 : i32, i32
  }
  func.func @transform_4(%arg0: i32) -> (i32, i32, i32) {
    %c0_i32 = arith.constant 0 : i32
    %c0_i32_0 = arith.constant 0 : i32
    %c0_i32_1 = arith.constant 0 : i32
    %c0_i32_2 = arith.constant 0 : i32
    return %c0_i32, %c0_i32_0, %c0_i32_1 : i32, i32, i32
  }
  func.func @transform_5(%arg0: i32) -> (i32, i32) {
    %c0_i32 = arith.constant 0 : i32
    %c0_i32_0 = arith.constant 0 : i32
    %c0_i32_1 = arith.constant 0 : i32
    return %c0_i32, %c0_i32_0 : i32, i32
  }
  func.func @transform_6(%arg0: i32) -> (i32, i32) {
    %c0_i32 = arith.constant 0 : i32
    %c0_i32_0 = arith.constant 0 : i32
    %c0_i32_1 = arith.constant 0 : i32
    return %c0_i32, %c0_i32_0 : i32, i32
  }
  func.func @transform_7(%arg0: i32) -> (i32, i32, i32) {
    %c0_i32 = arith.constant 0 : i32
    %c0_i32_0 = arith.constant 0 : i32
    %c0_i32_1 = arith.constant 0 : i32
    %c0_i32_2 = arith.constant 0 : i32
    return %c0_i32, %c0_i32_0, %c0_i32_1 : i32, i32, i32
  }
  func.func @transform_8(%arg0: i32) -> (i32, i32) {
    %c0_i32 = arith.constant 0 : i32
    %c0_i32_0 = arith.constant 0 : i32
    %c0_i32_1 = arith.constant 0 : i32
    return %c0_i32, %c0_i32_0 : i32, i32
  }
  func.func @transform_9(%arg0: i32) -> (i32, i32) {
    %c0_i32 = arith.constant 0 : i32
    %c0_i32_0 = arith.constant 0 : i32
    %c0_i32_1 = arith.constant 0 : i32
    return %c0_i32, %c0_i32_0 : i32, i32
  }
  func.func @transform_10(%arg0: i32) -> (i32, i32) {
    %c0_i32 = arith.constant 0 : i32
    %c0_i32_0 = arith.constant 0 : i32
    %c0_i32_1 = arith.constant 0 : i32
    return %c0_i32, %c0_i32_0 : i32, i32
  }
  func.func @transform_11(%arg0: i32) -> (i32, i32) {
    %c0_i32 = arith.constant 0 : i32
    %c0_i32_0 = arith.constant 0 : i32
    %c0_i32_1 = arith.constant 0 : i32
    return %c0_i32, %c0_i32_0 : i32, i32
  }
  func.func @transform_12(%arg0: i32) -> (i32, i32) {
    %c0_i32 = arith.constant 0 : i32
    %c0_i32_0 = arith.constant 0 : i32
    %c0_i32_1 = arith.constant 0 : i32
    return %c0_i32, %c0_i32_0 : i32, i32
  }
  func.func @transform_13(%arg0: i32) -> (i32, i32) {
    %c0_i32 = arith.constant 0 : i32
    %c0_i32_0 = arith.constant 0 : i32
    %c0_i32_1 = arith.constant 0 : i32
    return %c0_i32, %c0_i32_0 : i32, i32
  }
  func.func @transform_14(%arg0: i32) -> (i32, i32) {
    %c0_i32 = arith.constant 0 : i32
    %c0_i32_0 = arith.constant 0 : i32
    %c0_i32_1 = arith.constant 0 : i32
    return %c0_i32, %c0_i32_0 : i32, i32
  }
  func.func @transform_15(%arg0: i32) -> (i32, i32, i32) {
    %c0_i32 = arith.constant 0 : i32
    %c0_i32_0 = arith.constant 0 : i32
    %c0_i32_1 = arith.constant 0 : i32
    return %arg0, %c0_i32, %c0_i32_0 : i32, i32, i32
  }
}

</mosaic_0001>

<llo_original>
// kernel: tpu_custom_call.1
$region0: #{tpu_custom_call.1}
  #allocation0 [shape = 'u32[]', space=smem, size = 0x4, offset = 0x4, fixed_abs, tag = 'smem constant byte address 0x4 - core index']
  #allocation1 [shape = 'u32[144,128]{1,0:T(1,128)}', space=vmem, size = 0x12000, scoped, tag = 'internal scratch']
  #allocation2 [shape = 'f32[128,32]{1,0:T(8,128)}', space=vmem, size = 0x10000, scoped, tag = 'scratch operand']
  #allocation3 [shape = 'f32[72,32]{1,0:T(8,128)}', space=vmem, size = 0x9000, scoped, tag = 'scratch operand']
  #allocation4 [shape = 'f32[70,64]{1,0:T(8,128)}', space=vmem, size = 0x9000, scoped, tag = 'scratch operand']
  #allocation5 [shape = 'f32[40,64]{1,0:T(8,128)}', space=vmem, size = 0x5000, scoped, tag = 'scratch operand']
  #allocation6 [shape = 'f32[38,128]{1,0:T(8,128)}', space=vmem, size = 0x5000, scoped, tag = 'scratch operand']
  %s0 = inlined_call_operand.vmem [shape: bf16[2,128,60], index: 0, kind: input, shape index: {}]
  %s1 = inlined_call_operand.vmem [shape: bf16[60,32], index: 1, kind: input, shape index: {}]
  %s2 = inlined_call_operand.vmem [shape: f32[1,32], index: 2, kind: input, shape index: {}]
  %s3 = inlined_call_operand.vmem [shape: f32[1,32], index: 3, kind: input, shape index: {}]
  %s4 = inlined_call_operand.hbm [shape: bf16[3,32,64], index: 4, kind: input, shape index: {}]
  %s5 = inlined_call_operand.vmem [shape: f32[1,64], index: 5, kind: input, shape index: {}]
  %s6 = inlined_call_operand.vmem [shape: f32[1,64], index: 6, kind: input, shape index: {}]
  %s7 = inlined_call_operand.vmem [shape: bf16[3,64,128], index: 7, kind: input, shape index: {}]
  %s8 = inlined_call_operand.vmem [shape: f32[1,128], index: 8, kind: input, shape index: {}]
  %s9 = inlined_call_operand.vmem [shape: f32[1,128], index: 9, kind: input, shape index: {}]
  %s10 = inlined_call_operand.vmem [shape: bf16[4,19], index: 10, kind: input, shape index: {}]
  %s11 = inlined_call_operand.vmem [shape: bf16[128,128], index: 11, kind: input, shape index: {}]
  %s12 = inlined_call_operand.vmem [shape: f32[1,128], index: 12, kind: input, shape index: {}]
  %s13 = inlined_call_operand.vmem [shape: bf16[128,128], index: 13, kind: input, shape index: {}]
  %s14 = inlined_call_operand.vmem [shape: f32[1,128], index: 14, kind: input, shape index: {}]
  %s15 = inlined_call_operand.hbm [shape: f32[2,4,128], index: 15, kind: output, shape index: {}]
  %s16 = sld [smem:[#allocation0]]
  $region97: #{tpu_custom_call.1} parent=0
    _
  %s18 = ssub.s32 1, %s16
  %s19 = scalar_select 0, %s18, %s16
  $region1: #{tpu_custom_call.1} parent=0
    #allocation7 [shape = 'u8[24576]{0}', space=vmem, size = 0x6000, scoped, tag = 'input window, operand 4, single buffered']
    #allocation8 [shape = 's32[2]{0}', space=sflag, size = 0x8, scoped, tag = 'scoped memory for tpu_custom_call.1']
    #allocation9 [shape = 's32[2]{0}', space=sflag, size = 0x8, scoped, tag = 'scoped memory for tpu_custom_call.1']
    #allocation10 [shape = 'u8[4096]{0}', space=vmem, size = 0x1000, scoped, tag = 'output window, operand 0']
    %20 = vsyncpa [#allocation8], 0
    %21 = vsyncpa [#allocation9], 0
    %s22 = scalar_lea.sflag [#allocation9], 1
    %23 = vsyncpa %s22, 0
    loop: start=0, step=1, limit=4
    $region2: #{tpu_custom_call.1} parent=1 // loop_pre_header
      _
    $region3: #{tpu_custom_call.1} parent=1 // loop_header
      %s25 = sphi 0, %s29
      %p26 = scmp.ge.s32.totalorder %s25, 4
      %s35 = sphi 0, %s37
      %s38 = sphi 0, %s35
      %s39 = sphi 0, %s38
      %s55 = sphi 0, %s39
      %s59 = sphi 0, %s59
      %s61 = sphi 0, %s59
      %s62 = sphi 0, %s61
      %s76 = sphi 0, %s62
      %s80 = sphi 0, %s80
      %s82 = sphi 0, %s80
      %s83 = sphi 0, %s82
      %s97 = sphi 0, %s83
      %s101 = sphi 0, %s101
      %s103 = sphi 0, %s101
      %s104 = sphi 0, %s103
      %s118 = sphi 0, %s104
      %s122 = sphi 0, %s122
      %s124 = sphi 0, %s122
      %s125 = sphi 0, %s124
      %s139 = sphi 0, %s125
      %s143 = sphi 0, %s143
      %s145 = sphi 0, %s143
      %s146 = sphi 0, %s145
      %s160 = sphi 0, %s146
      %s164 = sphi 0, %s164
      %s166 = sphi 0, %s164
      %s167 = sphi 0, %s166
      %s181 = sphi 0, %s167
      %s185 = sphi 0, %s185
      %s187 = sphi 0, %s185
      %s188 = sphi 0, %s187
      %s202 = sphi 0, %s188
      %s206 = sphi 0, %s206
      %s208 = sphi 0, %s206
      %s209 = sphi 0, %s208
      %s223 = sphi 0, %s209
      %s227 = sphi 0, %s227
      %s229 = sphi 0, %s227
      %s230 = sphi 0, %s229
      %s244 = sphi 0, %s230
      %s248 = sphi 0, %s248
      %s250 = sphi 0, %s248
      %s251 = sphi 0, %s250
      %s265 = sphi 0, %s251
      %s269 = sphi 0, %s269
      %s271 = sphi 0, %s269
      %s272 = sphi 0, %s271
      %s286 = sphi 0, %s272
      %s290 = sphi 0, %s290
      %s292 = sphi 0, %s290
      %s293 = sphi 0, %s292
      %s307 = sphi 0, %s293
      %s311 = sphi 0, %s311
      %s313 = sphi 0, %s311
      %s314 = sphi 0, %s313
      %s328 = sphi 0, %s314
      %s332 = sphi 0, %s332
      %s334 = sphi 0, %s332
      %s335 = sphi 0, %s334
      %s349 = sphi 0, %s335
      %s355 = sphi 0, %s357
      %s358 = sphi 0, %s355
      %s359 = sphi 0, %s358
      %s375 = sphi 0, %s359
    $region4: #{tpu_custom_call.1} parent=1 // loop_header_branch
      %28 = sbr.rel (%p26) target = $region8
    $region5: #{tpu_custom_call.1} parent=1 // loop_body
      %s30 = ssub.s32 %s25, 1
      %s31 = ssub.s32 %s25, 2
      %s32 = sadd.s32 %s25, 1
      %s33 = ssub.s32 %s25, %s32
      %p34 = scmp.eq.s32.totalorder %s33, 0
      %s36 = sadd.s32 %s35, 1
      %s37 = scalar_select %p34, %s35, %s36
      %p40 = pneg %p34
      %p41 = scmp.eq.s32.totalorder %s25, 1
      %p42 = por %p40, %p41
      %p43 = scmp.ne.s32.totalorder %s35, %s38
      %p44 = scmp.eq.s32.totalorder %s25, 0
      %p45 = por %p43, %p44
      %p46 = scmp.ne.s32.totalorder %s35, %s38
      %p47 = scmp.eq.s32.totalorder %s30, 1
      %p48 = por %p46, %p47
      %p49 = scmp.ne.s32.totalorder %s38, %s39
      %p50 = scmp.eq.s32.totalorder %s30, 0
      %p51 = por %p49, %p50
      %p52 = scmp.ne.s32.totalorder %s38, %s39
      %p53 = scmp.eq.s32.totalorder %s31, 1
      %p54 = por %p52, %p53
      %p56 = scmp.ne.s32.totalorder %s39, %s55
      %p57 = scmp.eq.s32.totalorder %s31, 0
      %p58 = por %p56, %p57
      %s60 = sadd.s32 %s59, 1
      %p63 = scmp.eq.s32.totalorder %s25, 1
      %p64 = scmp.ne.s32.totalorder %s59, %s61
      %p65 = scmp.eq.s32.totalorder %s25, 0
      %p66 = por %p64, %p65
      %p67 = scmp.ne.s32.totalorder %s59, %s61
      %p68 = scmp.eq.s32.totalorder %s30, 1
      %p69 = por %p67, %p68
      %p70 = scmp.ne.s32.totalorder %s61, %s62
      %p71 = scmp.eq.s32.totalorder %s30, 0
      %p72 = por %p70, %p71
      %p73 = scmp.ne.s32.totalorder %s61, %s62
      %p74 = scmp.eq.s32.totalorder %s31, 1
      %p75 = por %p73, %p74
      %p77 = scmp.ne.s32.totalorder %s62, %s76
      %p78 = scmp.eq.s32.totalorder %s31, 0
      %p79 = por %p77, %p78
      %s81 = sadd.s32 %s80, 1
      %p84 = scmp.eq.s32.totalorder %s25, 1
      %p85 = scmp.ne.s32.totalorder %s80, %s82
      %p86 = scmp.eq.s32.totalorder %s25, 0
      %p87 = por %p85, %p86
      %p88 = scmp.ne.s32.totalorder %s80, %s82
      %p89 = scmp.eq.s32.totalorder %s30, 1
      %p90 = por %p88, %p89
      %p91 = scmp.ne.s32.totalorder %s82, %s83
      %p92 = scmp.eq.s32.totalorder %s30, 0
      %p93 = por %p91, %p92
      %p94 = scmp.ne.s32.totalorder %s82, %s83
      %p95 = scmp.eq.s32.totalorder %s31, 1
      %p96 = por %p94, %p95
      %p98 = scmp.ne.s32.totalorder %s83, %s97
      %p99 = scmp.eq.s32.totalorder %s31, 0
      %p100 = por %p98, %p99
      %s102 = sadd.s32 %s101, 1
      %p105 = scmp.eq.s32.totalorder %s25, 1
      %p106 = scmp.ne.s32.totalorder %s101, %s103
      %p107 = scmp.eq.s32.totalorder %s25, 0
      %p108 = por %p106, %p107
      %p109 = scmp.ne.s32.totalorder %s101, %s103
      %p110 = scmp.eq.s32.totalorder %s30, 1
      %p111 = por %p109, %p110
      %p112 = scmp.ne.s32.totalorder %s103, %s104
      %p113 = scmp.eq.s32.totalorder %s30, 0
      %p114 = por %p112, %p113
      %p115 = scmp.ne.s32.totalorder %s103, %s104
      %p116 = scmp.eq.s32.totalorder %s31, 1
      %p117 = por %p115, %p116
      %p119 = scmp.ne.s32.totalorder %s104, %s118
      %p120 = scmp.eq.s32.totalorder %s31, 0
      %p121 = por %p119, %p120
      %s123 = sadd.s32 %s122, 1
      %p126 = scmp.eq.s32.totalorder %s25, 1
      %p127 = scmp.ne.s32.totalorder %s122, %s124
      %p128 = scmp.eq.s32.totalorder %s25, 0
      %p129 = por %p127, %p128
      %p130 = scmp.ne.s32.totalorder %s122, %s124
      %p131 = scmp.eq.s32.totalorder %s30, 1
      %p132 = por %p130, %p131
      %p133 = scmp.ne.s32.totalorder %s124, %s125
      %p134 = scmp.eq.s32.totalorder %s30, 0
      %p135 = por %p133, %p134
      %p136 = scmp.ne.s32.totalorder %s124, %s125
      %p137 = scmp.eq.s32.totalorder %s31, 1
      %p138 = por %p136, %p137
      %p140 = scmp.ne.s32.totalorder %s125, %s139
      %p141 = scmp.eq.s32.totalorder %s31, 0
      %p142 = por %p140, %p141
      %s144 = sadd.s32 %s143, 1
      %p147 = scmp.eq.s32.totalorder %s25, 1
      %p148 = scmp.ne.s32.totalorder %s143, %s145
      %p149 = scmp.eq.s32.totalorder %s25, 0
      %p150 = por %p148, %p149
      %p151 = scmp.ne.s32.totalorder %s143, %s145
      %p152 = scmp.eq.s32.totalorder %s30, 1
      %p153 = por %p151, %p152
      %p154 = scmp.ne.s32.totalorder %s145, %s146
      %p155 = scmp.eq.s32.totalorder %s30, 0
      %p156 = por %p154, %p155
      %p157 = scmp.ne.s32.totalorder %s145, %s146
      %p158 = scmp.eq.s32.totalorder %s31, 1
      %p159 = por %p157, %p158
      %p161 = scmp.ne.s32.totalorder %s146, %s160
      %p162 = scmp.eq.s32.totalorder %s31, 0
      %p163 = por %p161, %p162
      %s165 = sadd.s32 %s164, 1
      %p168 = scmp.eq.s32.totalorder %s25, 1
      %p169 = scmp.ne.s32.totalorder %s164, %s166
      %p170 = scmp.eq.s32.totalorder %s25, 0
      %p171 = por %p169, %p170
      %p172 = scmp.ne.s32.totalorder %s164, %s166
      %p173 = scmp.eq.s32.totalorder %s30, 1
      %p174 = por %p172, %p173
      %p175 = scmp.ne.s32.totalorder %s166, %s167
      %p176 = scmp.eq.s32.totalorder %s30, 0
      %p177 = por %p175, %p176
      %p178 = scmp.ne.s32.totalorder %s166, %s167
      %p179 = scmp.eq.s32.totalorder %s31, 1
      %p180 = por %p178, %p179
      %p182 = scmp.ne.s32.totalorder %s167, %s181
      %p183 = scmp.eq.s32.totalorder %s31, 0
      %p184 = por %p182, %p183
      %s186 = sadd.s32 %s185, 1
      %p189 = scmp.eq.s32.totalorder %s25, 1
      %p190 = scmp.ne.s32.totalorder %s185, %s187
      %p191 = scmp.eq.s32.totalorder %s25, 0
      %p192 = por %p190, %p191
      %p193 = scmp.ne.s32.totalorder %s185, %s187
      %p194 = scmp.eq.s32.totalorder %s30, 1
      %p195 = por %p193, %p194
      %p196 = scmp.ne.s32.totalorder %s187, %s188
      %p197 = scmp.eq.s32.totalorder %s30, 0
      %p198 = por %p196, %p197
      %p199 = scmp.ne.s32.totalorder %s187, %s188
      %p200 = scmp.eq.s32.totalorder %s31, 1
      %p201 = por %p199, %p200
      %p203 = scmp.ne.s32.totalorder %s188, %s202
      %p204 = scmp.eq.s32.totalorder %s31, 0
      %p205 = por %p203, %p204
      %s207 = sadd.s32 %s206, 1
      %p210 = scmp.eq.s32.totalorder %s25, 1
      %p211 = scmp.ne.s32.totalorder %s206, %s208
      %p212 = scmp.eq.s32.totalorder %s25, 0
      %p213 = por %p211, %p212
      %p214 = scmp.ne.s32.totalorder %s206, %s208
      %p215 = scmp.eq.s32.totalorder %s30, 1
      %p216 = por %p214, %p215
      %p217 = scmp.ne.s32.totalorder %s208, %s209
      %p218 = scmp.eq.s32.totalorder %s30, 0
      %p219 = por %p217, %p218
      %p220 = scmp.ne.s32.totalorder %s208, %s209
      %p221 = scmp.eq.s32.totalorder %s31, 1
      %p222 = por %p220, %p221
      %p224 = scmp.ne.s32.totalorder %s209, %s223
      %p225 = scmp.eq.s32.totalorder %s31, 0
      %p226 = por %p224, %p225
      %s228 = sadd.s32 %s227, 1
      %p231 = scmp.eq.s32.totalorder %s25, 1
      %p232 = scmp.ne.s32.totalorder %s227, %s229
      %p233 = scmp.eq.s32.totalorder %s25, 0
      %p234 = por %p232, %p233
      %p235 = scmp.ne.s32.totalorder %s227, %s229
      %p236 = scmp.eq.s32.totalorder %s30, 1
      %p237 = por %p235, %p236
      %p238 = scmp.ne.s32.totalorder %s229, %s230
      %p239 = scmp.eq.s32.totalorder %s30, 0
      %p240 = por %p238, %p239
      %p241 = scmp.ne.s32.totalorder %s229, %s230
      %p242 = scmp.eq.s32.totalorder %s31, 1
      %p243 = por %p241, %p242
      %p245 = scmp.ne.s32.totalorder %s230, %s244
      %p246 = scmp.eq.s32.totalorder %s31, 0
      %p247 = por %p245, %p246
      %s249 = sadd.s32 %s248, 1
      %p252 = scmp.eq.s32.totalorder %s25, 1
      %p253 = scmp.ne.s32.totalorder %s248, %s250
      %p254 = scmp.eq.s32.totalorder %s25, 0
      %p255 = por %p253, %p254
      %p256 = scmp.ne.s32.totalorder %s248, %s250
      %p257 = scmp.eq.s32.totalorder %s30, 1
      %p258 = por %p256, %p257
      %p259 = scmp.ne.s32.totalorder %s250, %s251
      %p260 = scmp.eq.s32.totalorder %s30, 0
      %p261 = por %p259, %p260
      %p262 = scmp.ne.s32.totalorder %s250, %s251
      %p263 = scmp.eq.s32.totalorder %s31, 1
      %p264 = por %p262, %p263
      %p266 = scmp.ne.s32.totalorder %s251, %s265
      %p267 = scmp.eq.s32.totalorder %s31, 0
      %p268 = por %p266, %p267
      %s270 = sadd.s32 %s269, 1
      %p273 = scmp.eq.s32.totalorder %s25, 1
      %p274 = scmp.ne.s32.totalorder %s269, %s271
      %p275 = scmp.eq.s32.totalorder %s25, 0
      %p276 = por %p274, %p275
      %p277 = scmp.ne.s32.totalorder %s269, %s271
      %p278 = scmp.eq.s32.totalorder %s30, 1
      %p279 = por %p277, %p278
      %p280 = scmp.ne.s32.totalorder %s271, %s272
      %p281 = scmp.eq.s32.totalorder %s30, 0
      %p282 = por %p280, %p281
      %p283 = scmp.ne.s32.totalorder %s271, %s272
      %p284 = scmp.eq.s32.totalorder %s31, 1
      %p285 = por %p283, %p284
      %p287 = scmp.ne.s32.totalorder %s272, %s286
      %p288 = scmp.eq.s32.totalorder %s31, 0
      %p289 = por %p287, %p288
      %s291 = sadd.s32 %s290, 1
      %p294 = scmp.eq.s32.totalorder %s25, 1
      %p295 = scmp.ne.s32.totalorder %s290, %s292
      %p296 = scmp.eq.s32.totalorder %s25, 0
      %p297 = por %p295, %p296
      %p298 = scmp.ne.s32.totalorder %s290, %s292
      %p299 = scmp.eq.s32.totalorder %s30, 1
      %p300 = por %p298, %p299
      %p301 = scmp.ne.s32.totalorder %s292, %s293
      %p302 = scmp.eq.s32.totalorder %s30, 0
      %p303 = por %p301, %p302
      %p304 = scmp.ne.s32.totalorder %s292, %s293
      %p305 = scmp.eq.s32.totalorder %s31, 1
      %p306 = por %p304, %p305
      %p308 = scmp.ne.s32.totalorder %s293, %s307
      %p309 = scmp.eq.s32.totalorder %s31, 0
      %p310 = por %p308, %p309
      %s312 = sadd.s32 %s311, 1
      %p315 = scmp.eq.s32.totalorder %s25, 1
      %p316 = scmp.ne.s32.totalorder %s311, %s313
      %p317 = scmp.eq.s32.totalorder %s25, 0
      %p318 = por %p316, %p317
      %p319 = scmp.ne.s32.totalorder %s311, %s313
      %p320 = scmp.eq.s32.totalorder %s30, 1
      %p321 = por %p319, %p320
      %p322 = scmp.ne.s32.totalorder %s313, %s314
      %p323 = scmp.eq.s32.totalorder %s30, 0
      %p324 = por %p322, %p323
      %p325 = scmp.ne.s32.totalorder %s313, %s314
      %p326 = scmp.eq.s32.totalorder %s31, 1
      %p327 = por %p325, %p326
      %p329 = scmp.ne.s32.totalorder %s314, %s328
      %p330 = scmp.eq.s32.totalorder %s31, 0
      %p331 = por %p329, %p330
      %s333 = sadd.s32 %s332, 1
      %p336 = scmp.eq.s32.totalorder %s25, 1
      %p337 = scmp.ne.s32.totalorder %s332, %s334
      %p338 = scmp.eq.s32.totalorder %s25, 0
      %p339 = por %p337, %p338
      %p340 = scmp.ne.s32.totalorder %s332, %s334
      %p341 = scmp.eq.s32.totalorder %s30, 1
      %p342 = por %p340, %p341
      %p343 = scmp.ne.s32.totalorder %s334, %s335
      %p344 = scmp.eq.s32.totalorder %s30, 0
      %p345 = por %p343, %p344
      %p346 = scmp.ne.s32.totalorder %s334, %s335
      %p347 = scmp.eq.s32.totalorder %s31, 1
      %p348 = por %p346, %p347
      %p350 = scmp.ne.s32.totalorder %s335, %s349
      %p351 = scmp.eq.s32.totalorder %s31, 0
      %p352 = por %p350, %p351
      %s353 = ssub.s32 %s25, %s32
      %p354 = scmp.eq.s32.totalorder %s353, 0
      %s356 = sadd.s32 %s355, 1
      %s357 = scalar_select %p354, %s355, %s356
      %p360 = pneg %p354
      %p361 = scmp.eq.s32.totalorder %s25, 1
      %p362 = por %p360, %p361
      %p363 = scmp.ne.s32.totalorder %s355, %s358
      %p364 = scmp.eq.s32.totalorder %s25, 0
      %p365 = por %p363, %p364
      %p366 = scmp.ne.s32.totalorder %s355, %s358
      %p367 = scmp.eq.s32.totalorder %s30, 1
      %p368 = por %p366, %p367
      %p369 = scmp.ne.s32.totalorder %s358, %s359
      %p370 = scmp.eq.s32.totalorder %s30, 0
      %p371 = por %p369, %p370
      %p372 = scmp.ne.s32.totalorder %s358, %s359
      %p373 = scmp.eq.s32.totalorder %s31, 1
      %p374 = por %p372, %p373
      %p376 = scmp.ne.s32.totalorder %s359, %s375
      %p377 = scmp.eq.s32.totalorder %s31, 0
      %p378 = por %p376, %p377
      %p379 = scmp.le.s32.totalorder 1, %s25
      %p380 = scmp.lt.s32.totalorder %s25, 3
      %p381 = pnand %p379, %p380
      %p382 = pneg %p381
      // Predicated region
      $region9: #{tpu_custom_call.1} parent=5 // pred_check
        _
      $region10: #{tpu_custom_call.1} parent=5 // pred_check_branch
        %384 = sbr.rel (%p381) target = $region12
      $region11: #{tpu_custom_call.1} parent=5 // pred_region
        %s385 = ssub.s32 %s25, 1
        // Predicated region
        $region13: #{tpu_custom_call.1} parent=11 // pred_check
          %p386 = pneg %p72
        $region14: #{tpu_custom_call.1} parent=11 // pred_check_branch
          %388 = sbr.rel (%p386) target = $region16
        $region15: #{tpu_custom_call.1} parent=11 // pred_region
          _
        $region16: #{tpu_custom_call.1} parent=11 // pred_fallthru
          _
        // Predicated region
        $region17: #{tpu_custom_call.1} parent=11 // pred_check
          %p389 = pneg %p93
        $region18: #{tpu_custom_call.1} parent=11 // pred_check_branch
          %391 = sbr.rel (%p389) target = $region20
        $region19: #{tpu_custom_call.1} parent=11 // pred_region
          _
        $region20: #{tpu_custom_call.1} parent=11 // pred_fallthru
          _
        // Predicated region
        $region21: #{tpu_custom_call.1} parent=11 // pred_check
          %p392 = pneg %p114
        $region22: #{tpu_custom_call.1} parent=11 // pred_check_branch
          %394 = sbr.rel (%p392) target = $region24
        $region23: #{tpu_custom_call.1} parent=11 // pred_region
          _
        $region24: #{tpu_custom_call.1} parent=11 // pred_fallthru
          _
        // Predicated region
        $region25: #{tpu_custom_call.1} parent=11 // pred_check
          %p395 = pneg %p135
        $region26: #{tpu_custom_call.1} parent=11 // pred_check_branch
          %397 = sbr.rel (%p395) target = $region28
        $region27: #{tpu_custom_call.1} parent=11 // pred_region
          %s399 = ssub.s32 768, 768
          %400 = vsyncadd [#allocation8], %s399
          %s401 = sshll.u32 [#allocation7], 4
          %s402 = int_to_ptr.vmem [resolvable:$true] %s401
          %407 = dma.hbm_to_vmem [thread:$0]  %s4, 768, %s402, [#allocation8], 64, 64, 4
        $region28: #{tpu_custom_call.1} parent=11 // pred_fallthru
          _
        // Predicated region
        $region29: #{tpu_custom_call.1} parent=11 // pred_check
          %p408 = pneg %p156
        $region30: #{tpu_custom_call.1} parent=11 // pred_check_branch
          %410 = sbr.rel (%p408) target = $region32
        $region31: #{tpu_custom_call.1} parent=11 // pred_region
          _
        $region32: #{tpu_custom_call.1} parent=11 // pred_fallthru
          _
        // Predicated region
        $region33: #{tpu_custom_call.1} parent=11 // pred_check
          %p411 = pneg %p177
        $region34: #{tpu_custom_call.1} parent=11 // pred_check_branch
          %413 = sbr.rel (%p411) target = $region36
        $region35: #{tpu_custom_call.1} parent=11 // pred_region
          _
        $region36: #{tpu_custom_call.1} parent=11 // pred_fallthru
          _
        // Predicated region
        $region37: #{tpu_custom_call.1} parent=11 // pred_check
          %p414 = pneg %p198
        $region38: #{tpu_custom_call.1} parent=11 // pred_check_branch
          %416 = sbr.rel (%p414) target = $region40
        $region39: #{tpu_custom_call.1} parent=11 // pred_region
          _
        $region40: #{tpu_custom_call.1} parent=11 // pred_fallthru
          _
        // Predicated region
        $region41: #{tpu_custom_call.1} parent=11 // pred_check
          %p417 = pneg %p219
        $region42: #{tpu_custom_call.1} parent=11 // pred_check_branch
          %419 = sbr.rel (%p417) target = $region44
        $region43: #{tpu_custom_call.1} parent=11 // pred_region
          _
        $region44: #{tpu_custom_call.1} parent=11 // pred_fallthru
          _
        // Predicated region
        $region45: #{tpu_custom_call.1} parent=11 // pred_check
          %p420 = pneg %p240
        $region46: #{tpu_custom_call.1} parent=11 // pred_check_branch
          %422 = sbr.rel (%p420) target = $region48
        $region47: #{tpu_custom_call.1} parent=11 // pred_region
          _
        $region48: #{tpu_custom_call.1} parent=11 // pred_fallthru
          _
        // Predicated region
        $region49: #{tpu_custom_call.1} parent=11 // pred_check
          %p423 = pneg %p261
        $region50: #{tpu_custom_call.1} parent=11 // pred_check_branch
          %425 = sbr.rel (%p423) target = $region52
        $region51: #{tpu_custom_call.1} parent=11 // pred_region
          _
        $region52: #{tpu_custom_call.1} parent=11 // pred_fallthru
          _
        // Predicated region
        $region53: #{tpu_custom_call.1} parent=11 // pred_check
          %p426 = pneg %p282
        $region54: #{tpu_custom_call.1} parent=11 // pred_check_branch
          %428 = sbr.rel (%p426) target = $region56
        $region55: #{tpu_custom_call.1} parent=11 // pred_region
          _
        $region56: #{tpu_custom_call.1} parent=11 // pred_fallthru
          _
        // Predicated region
        $region57: #{tpu_custom_call.1} parent=11 // pred_check
          %p429 = pneg %p303
        $region58: #{tpu_custom_call.1} parent=11 // pred_check_branch
          %431 = sbr.rel (%p429) target = $region60
        $region59: #{tpu_custom_call.1} parent=11 // pred_region
          _
        $region60: #{tpu_custom_call.1} parent=11 // pred_fallthru
          _
        // Predicated region
        $region61: #{tpu_custom_call.1} parent=11 // pred_check
          %p432 = pneg %p324
        $region62: #{tpu_custom_call.1} parent=11 // pred_check_branch
          %434 = sbr.rel (%p432) target = $region64
        $region63: #{tpu_custom_call.1} parent=11 // pred_region
          _
        $region64: #{tpu_custom_call.1} parent=11 // pred_fallthru
          _
        // Predicated region
        $region65: #{tpu_custom_call.1} parent=11 // pred_check
          %p435 = pneg %p345
        $region66: #{tpu_custom_call.1} parent=11 // pred_check_branch
          %437 = sbr.rel (%p435) target = $region68
        $region67: #{tpu_custom_call.1} parent=11 // pred_region
          _
        $region68: #{tpu_custom_call.1} parent=11 // pred_fallthru
          _
      $region12: #{tpu_custom_call.1} parent=5 // pred_fallthru
        _
      %p438 = scmp.lt.s32.totalorder %s25, 2
      // Predicated region
      $region69: #{tpu_custom_call.1} parent=5 // pred_check
        %p439 = pneg %p438
      $region70: #{tpu_custom_call.1} parent=5 // pred_check_branch
        %441 = sbr.rel (%p439) target = $region72
      $region71: #{tpu_custom_call.1} parent=5 // pred_region
        // Predicated region
        $region73: #{tpu_custom_call.1} parent=71 // pred_check
          %p442 = pneg %p45
        $region74: #{tpu_custom_call.1} parent=71 // pred_check_branch
          %444 = sbr.rel (%p442) target = $region76
        $region75: #{tpu_custom_call.1} parent=71 // pred_region
          %p445 = scmp.lt.s32.totalorder %s25, 1
          %s446 = scalar_select %p445, %s25, 1
          %s447 = smul.addr %s446, 16
          %s448 = smul.addr %s447, 4
          %s449 = scalar_lea.vmem %s0, %s448
        $region76: #{tpu_custom_call.1} parent=71 // pred_fallthru
          _
      $region72: #{tpu_custom_call.1} parent=5 // pred_fallthru
        _
      %p450 = scmp.le.s32.totalorder 1, %s25
      %p451 = scmp.lt.s32.totalorder %s25, 3
      %p452 = pnand %p450, %p451
      %p453 = pneg %p452
      // Predicated region
      $region77: #{tpu_custom_call.1} parent=5 // pred_check
        _
      $region78: #{tpu_custom_call.1} parent=5 // pred_check_branch
        %455 = sbr.rel (%p452) target = $region80
      $region79: #{tpu_custom_call.1} parent=5 // pred_region
        %s456 = ssub.s32 %s25, 1
        // Predicated region
        $region81: #{tpu_custom_call.1} parent=79 // pred_check
          %p457 = pneg %p135
        $region82: #{tpu_custom_call.1} parent=79 // pred_check_branch
          %459 = sbr.rel (%p457) target = $region84
        $region83: #{tpu_custom_call.1} parent=79 // pred_region
          %460 = dma.done [#allocation8], 768
        $region84: #{tpu_custom_call.1} parent=79 // pred_fallthru
          _
        %p461 = scmp.lt.s32.totalorder %s30, 1
        %s462 = scalar_select %p461, %s30, 1
        %s463 = smul.addr %s462, 16
        %s464 = smul.addr %s463, 4
        %s465 = scalar_lea.vmem %s0, %s464
        %p466 = pneg %p51
        %p467 = pneg %p48
        %p468 = pneg %p72
        %p469 = pneg %p69
        %p470 = pneg %p93
        %p471 = pneg %p90
        %p472 = pneg %p114
        %p473 = pneg %p111
        %p474 = pneg %p135
        %p475 = pneg %p132
        %p476 = pneg %p156
        %p477 = pneg %p153
        %p478 = pneg %p177
        %p479 = pneg %p174
        %p480 = pneg %p198
        %p481 = pneg %p195
        %p482 = pneg %p219
        %p483 = pneg %p216
        %p484 = pneg %p240
        %p485 = pneg %p237
        %p486 = pneg %p261
        %p487 = pneg %p258
        %p488 = pneg %p282
        %p489 = pneg %p279
        %p490 = pneg %p303
        %p491 = pneg %p300
        %p492 = pneg %p324
        %p493 = pneg %p321
        %p494 = pneg %p345
        %p495 = pneg %p342
        %p496 = pneg %p371
        %p497 = pneg %p368
        %s498 = sand.u32 %s358, 1
        %s499 = scalar_lea.sflag [#allocation9], %s498
        %s500 = sand.u32 %s358, 1
        %s501 = smul.addr %s500, 4
        %s502 = scalar_lea.vmem [#allocation10], %s501
        %p503 = scmp.lt.s32.totalorder %s30, 1
        %s504 = scalar_select %p503, %s30, 1
        %s505 = smul.addr %s504, 16
        %s506 = smul.addr %s505, 4
        %s507 = scalar_lea.vmem %s0, %s506
        %v509 = vld [vmem:[%s507] sm:$0xf]
        %v510 = vld [vmem:[%s507 + $0x4] sm:$0xf]
        %v511 = vld [vmem:[%s507 + $0x8] sm:$0xf]
        %v512 = vld [vmem:[%s507 + $0xc] sm:$0xf]
        %v513 = vld [vmem:[%s507 + $0x10] sm:$0xf]
        %v514 = vld [vmem:[%s507 + $0x14] sm:$0xf]
        %v515 = vld [vmem:[%s507 + $0x18] sm:$0xf]
        %v516 = vld [vmem:[%s507 + $0x1c] sm:$0xf]
        %v517 = vld [vmem:[%s507 + $0x20] sm:$0xf]
        %v518 = vld [vmem:[%s507 + $0x24] sm:$0xf]
        %v519 = vld [vmem:[%s507 + $0x28] sm:$0xf]
        %v520 = vld [vmem:[%s507 + $0x2c] sm:$0xf]
        %v521 = vld [vmem:[%s507 + $0x30] sm:$0xf]
        %v522 = vld [vmem:[%s507 + $0x34] sm:$0xf]
        %v523 = vld [vmem:[%s507 + $0x38] sm:$0xf]
        %v524 = vld [vmem:[%s507 + $0x3c] sm:$0xf]
        %v525 = vld [vmem:[%s1] sm:$0xf]
        %v526 = vld [vmem:[%s1 + $0x4] sm:$0xf]
        %v527 = vld [vmem:[%s1 + $0x8] sm:$0xf]
        %v528 = vld [vmem:[%s1 + $0xc] sm:$0xf]
        %v529 = vld [vmem:[%s1 + $0x10] sm:$0xf]
        %v530 = vld [vmem:[%s1 + $0x14] sm:$0xf]
        %v531 = vld [vmem:[%s1 + $0x18] sm:$0xf]
        %v532 = vld [vmem:[%s1 + $0x1c] sm:$0x3]
        %v549 = vunpack.c.l.b16 %v509
        %v550 = vunpack.c.l.b16 %v510
        %v551 = vunpack.c.l.b16 %v511
        %v552 = vunpack.c.l.b16 %v512
        %v553 = vunpack.c.l.b16 %v513
        %v554 = vunpack.c.l.b16 %v514
        %v555 = vunpack.c.l.b16 %v515
        %v556 = vunpack.c.l.b16 %v516
        %v557 = vunpack.c.l.b16 %v517
        %v558 = vunpack.c.l.b16 %v518
        %v559 = vunpack.c.l.b16 %v519
        %v560 = vunpack.c.l.b16 %v520
        %v561 = vunpack.c.l.b16 %v521
        %v562 = vunpack.c.l.b16 %v522
        %v563 = vunpack.c.l.b16 %v523
        %v564 = vunpack.c.l.b16 %v524
        %v565 = vpack.c.b16 %v550, %v549
        %v566 = vpack.c.b16 %v552, %v551
        %v567 = vpack.c.b16 %v554, %v553
        %v568 = vpack.c.b16 %v556, %v555
        %v569 = vpack.c.b16 %v558, %v557
        %v570 = vpack.c.b16 %v560, %v559
        %v571 = vpack.c.b16 %v562, %v561
        %v572 = vpack.c.b16 %v564, %v563
        %v581 = vunpack.c.l.b16 %v525
        %v582 = vunpack.c.l.b16 %v526
        %v583 = vunpack.c.l.b16 %v527
        %v584 = vunpack.c.l.b16 %v528
        %v585 = vunpack.c.l.b16 %v529
        %v586 = vunpack.c.l.b16 %v530
        %v587 = vunpack.c.l.b16 %v531
        %v588 = vunpack.c.l.b16 %v532
        %v589 = vpack.c.b16 %v582, %v581
        %v590 = vpack.c.b16 %v584, %v583
        %v591 = vpack.c.b16 %v586, %v585
        %v592 = vpack.c.b16 %v588, %v587
        %vm596 = vcmask 490496
        %v598 = vsel %vm596, %v565, 0
        %v601 = vsel %vm596, %v566, 0
        %v604 = vsel %vm596, %v567, 0
        %v607 = vsel %vm596, %v568, 0
        %v610 = vsel %vm596, %v569, 0
        %v613 = vsel %vm596, %v570, 0
        %v616 = vsel %vm596, %v571, 0
        %v619 = vsel %vm596, %v572, 0
        %vm621 = vcmask 1045504
        %v623 = vsel %vm621, %v592, 0
        %625 = vmatprep.subr.bf16.mxu0 0
        %626 = vmatpush1.bf16.msra.mxu0 0
        %627 = vmatprep.subr.bf16.mxu0 0
        %628 = vmatpush1.bf16.msra.mxu0 0
        %629 = vmatprep.subr.bf16.mxu0 0
        %630 = vmatpush1.bf16.msra.mxu0 0
        %631 = vmatprep.subr.bf16.mxu0 0
        %632 = vmatpush1.bf16.msra.mxu0 0
        %633 = vmatprep.subr.bf16.mxu0 0
        %634 = vmatpush1.bf16.msra.mxu0 %v623
        %635 = vmatprep.subr.bf16.mxu0 0
        %636 = vmatpush1.bf16.msra.mxu0 %v591
        %637 = vmatprep.subr.bf16.mxu0 0
        %638 = vmatpush1.bf16.msra.mxu0 %v590
        %639 = vmatprep.subr.bf16.mxu0 0
        %640 = vmatpush1.bf16.msra.mxu0 %v589
        %641 = vmatprep.subr.bf16.mxu0 0
        %642 = vmatpush2.bf16.msra.mxu0 0
        %643 = vmatprep.subr.bf16.mxu0 0
        %644 = vmatpush2.bf16.msra.mxu0 0
        %645 = vmatprep.subr.bf16.mxu0 0
        %646 = vmatpush2.bf16.msra.mxu0 0
        %647 = vmatprep.subr.bf16.mxu0 0
        %648 = vmatpush2.bf16.msra.mxu0 0
        %649 = vmatprep.subr.bf16.mxu0 0
        %650 = vmatpush2.bf16.msra.mxu0 0
        %651 = vmatprep.subr.bf16.mxu0 0
        %652 = vmatpush2.bf16.msra.mxu0 0
        %653 = vmatprep.subr.bf16.mxu0 0
        %654 = vmatpush2.bf16.msra.mxu0 0
        %655 = vmatprep.subr.bf16.mxu0 0
        %656 = vmatpush2.bf16.msra.mxu0 0
        %657 = vmatprep.mubr.bf16.mxu0 0
        %658 = vmatmul.mubr.bf16.gmra.mxu0 %v598
        %v659 = vpop.f32.mrf.mxu0
        %v660 = vadd.f32 0.0, %v659
        %v661 = vpop.f32.mrf.mxu0
        %v662 = vpop.f32.mrf.mxu0
        %v663 = vadd.f32 0.0, %v662
        %v664 = vpop.f32.mrf.mxu0
        %665 = vmatprep.mubr.bf16.mxu0 0
        %666 = vmatmul.mubr.bf16.gmra.mxu0 %v601
        %v667 = vpop.f32.mrf.mxu0
        %v668 = vadd.f32 0.0, %v667
        %v669 = vpop.f32.mrf.mxu0
        %v670 = vpop.f32.mrf.mxu0
        %v671 = vadd.f32 0.0, %v670
        %v672 = vpop.f32.mrf.mxu0
        %673 = vmatprep.mubr.bf16.mxu0 0
        %674 = vmatmul.mubr.bf16.gmra.mxu0 %v604
        %v675 = vpop.f32.mrf.mxu0
        %v676 = vadd.f32 0.0, %v675
        %v677 = vpop.f32.mrf.mxu0
        %v678 = vpop.f32.mrf.mxu0
        %v679 = vadd.f32 0.0, %v678
        %v680 = vpop.f32.mrf.mxu0
        %681 = vmatprep.mubr.bf16.mxu0 0
        %682 = vmatmul.mubr.bf16.gmra.mxu0 %v607
        %v683 = vpop.f32.mrf.mxu0
        %v684 = vadd.f32 0.0, %v683
        %v685 = vpop.f32.mrf.mxu0
        %v686 = vpop.f32.mrf.mxu0
        %v687 = vadd.f32 0.0, %v686
        %v688 = vpop.f32.mrf.mxu0
        %689 = vmatprep.mubr.bf16.mxu0 0
        %690 = vmatmul.mubr.bf16.gmra.mxu0 %v610
        %v691 = vpop.f32.mrf.mxu0
        %v692 = vadd.f32 0.0, %v691
        %v693 = vpop.f32.mrf.mxu0
        %v694 = vpop.f32.mrf.mxu0
        %v695 = vadd.f32 0.0, %v694
        %v696 = vpop.f32.mrf.mxu0
        %697 = vmatprep.mubr.bf16.mxu0 0
        %698 = vmatmul.mubr.bf16.gmra.mxu0 %v613
        %v699 = vpop.f32.mrf.mxu0
        %v700 = vadd.f32 0.0, %v699
        %v701 = vpop.f32.mrf.mxu0
        %v702 = vpop.f32.mrf.mxu0
        %v703 = vadd.f32 0.0, %v702
        %v704 = vpop.f32.mrf.mxu0
        %705 = vmatprep.mubr.bf16.mxu0 0
        %706 = vmatmul.mubr.bf16.gmra.mxu0 %v616
        %v707 = vpop.f32.mrf.mxu0
        %v708 = vadd.f32 0.0, %v707
        %v709 = vpop.f32.mrf.mxu0
        %v710 = vpop.f32.mrf.mxu0
        %v711 = vadd.f32 0.0, %v710
        %v712 = vpop.f32.mrf.mxu0
        %713 = vmatprep.mubr.bf16.mxu0 0
        %714 = vmatmul.mubr.bf16.gmra.mxu0 %v619
        %v715 = vpop.f32.mrf.mxu0
        %v716 = vadd.f32 0.0, %v715
        %v717 = vpop.f32.mrf.mxu0
        %v718 = vpop.f32.mrf.mxu0
        %v719 = vadd.f32 0.0, %v718
        %v720 = vpop.f32.mrf.mxu0
        %721 = vdwg.mxu0
        %v722 = vld [vmem:[%s2] sm:$0x1]
        %v724 = vlaneseq
        %v725 = vshrl.u32 %v724, 7
        %v726 = vsub.s32 0, %v725
        %v727 = vrot.slane %v722, %v726
        %v729 = vmul.f32 %v660, %v727
        %v730 = vmul.f32 %v663, %v727
        %v731 = vmul.f32 %v668, %v727
        %v732 = vmul.f32 %v671, %v727
        %v733 = vmul.f32 %v676, %v727
        %v734 = vmul.f32 %v679, %v727
        %v735 = vmul.f32 %v684, %v727
        %v736 = vmul.f32 %v687, %v727
        %v737 = vmul.f32 %v692, %v727
        %v738 = vmul.f32 %v695, %v727
        %v739 = vmul.f32 %v700, %v727
        %v740 = vmul.f32 %v703, %v727
        %v741 = vmul.f32 %v708, %v727
        %v742 = vmul.f32 %v711, %v727
        %v743 = vmul.f32 %v716, %v727
        %v744 = vmul.f32 %v719, %v727
        %v745 = vld [vmem:[%s3] sm:$0x1]
        %v747 = vlaneseq
        %v748 = vshrl.u32 %v747, 7
        %v749 = vsub.s32 0, %v748
        %v750 = vrot.slane %v745, %v749
        %v752 = vadd.f32 %v729, %v750
        %v753 = vadd.f32 %v730, %v750
        %v754 = vadd.f32 %v731, %v750
        %v755 = vadd.f32 %v732, %v750
        %v756 = vadd.f32 %v733, %v750
        %v757 = vadd.f32 %v734, %v750
        %v758 = vadd.f32 %v735, %v750
        %v759 = vadd.f32 %v736, %v750
        %v760 = vadd.f32 %v737, %v750
        %v761 = vadd.f32 %v738, %v750
        %v762 = vadd.f32 %v739, %v750
        %v763 = vadd.f32 %v740, %v750
        %v764 = vadd.f32 %v741, %v750
        %v765 = vadd.f32 %v742, %v750
        %v766 = vadd.f32 %v743, %v750
        %v767 = vadd.f32 %v744, %v750
        %v768 = vmax.f32 %v752, 0.0
        %v769 = vmax.f32 %v753, 0.0
        %v770 = vmax.f32 %v754, 0.0
        %v771 = vmax.f32 %v755, 0.0
        %v772 = vmax.f32 %v756, 0.0
        %v773 = vmax.f32 %v757, 0.0
        %v774 = vmax.f32 %v758, 0.0
        %v775 = vmax.f32 %v759, 0.0
        %v776 = vmax.f32 %v760, 0.0
        %v777 = vmax.f32 %v761, 0.0
        %v778 = vmax.f32 %v762, 0.0
        %v779 = vmax.f32 %v763, 0.0
        %v780 = vmax.f32 %v764, 0.0
        %v781 = vmax.f32 %v765, 0.0
        %v782 = vmax.f32 %v766, 0.0
        %v783 = vmax.f32 %v767, 0.0
        %vm784 = vcmask 261120
        %785 = vst.msk [vmem:[#allocation2] sm:$0xff] %vm784, %v768
        %786 = vst.msk [vmem:[#allocation2 + $0x8] sm:$0xff] %vm784, %v769
        %787 = vst.msk [vmem:[#allocation2 + $0x10] sm:$0xff] %vm784, %v770
        %788 = vst.msk [vmem:[#allocation2 + $0x18] sm:$0xff] %vm784, %v771
        %789 = vst.msk [vmem:[#allocation2 + $0x20] sm:$0xff] %vm784, %v772
        %790 = vst.msk [vmem:[#allocation2 + $0x28] sm:$0xff] %vm784, %v773
        %791 = vst.msk [vmem:[#allocation2 + $0x30] sm:$0xff] %vm784, %v774
        %792 = vst.msk [vmem:[#allocation2 + $0x38] sm:$0xff] %vm784, %v775
        %793 = vst.msk [vmem:[#allocation2 + $0x40] sm:$0xff] %vm784, %v776
        %794 = vst.msk [vmem:[#allocation2 + $0x48] sm:$0xff] %vm784, %v777
        %795 = vst.msk [vmem:[#allocation2 + $0x50] sm:$0xff] %vm784, %v778
        %796 = vst.msk [vmem:[#allocation2 + $0x58] sm:$0xff] %vm784, %v779
        %797 = vst.msk [vmem:[#allocation2 + $0x60] sm:$0xff] %vm784, %v780
        %798 = vst.msk [vmem:[#allocation2 + $0x68] sm:$0xff] %vm784, %v781
        %799 = vst.msk [vmem:[#allocation2 + $0x70] sm:$0xff] %vm784, %v782
        %800 = vst.msk [vmem:[#allocation2 + $0x78] sm:$0xff] %vm784, %v783
        %v801 = vld [vmem:[#allocation2] ss:$2 sm:$0xff]
        %s802 = scalar_lea.vmem [#allocation2], 16
        %v803 = vld [vmem:[%s802] ss:$2 sm:$0xff]
        %s804 = scalar_lea.vmem [#allocation2], 32
        %v805 = vld [vmem:[%s804] ss:$2 sm:$0xff]
        %s806 = scalar_lea.vmem [#allocation2], 48
        %v807 = vld [vmem:[%s806] ss:$2 sm:$0xff]
        %s808 = scalar_lea.vmem [#allocation2], 64
        %v809 = vld [vmem:[%s808] ss:$2 sm:$0xff]
        %s810 = scalar_lea.vmem [#allocation2], 80
        %v811 = vld [vmem:[%s810] ss:$2 sm:$0xff]
        %s812 = scalar_lea.vmem [#allocation2], 96
        %v813 = vld [vmem:[%s812] ss:$2 sm:$0xff]
        %s814 = scalar_lea.vmem [#allocation2], 112
        %v815 = vld [vmem:[%s814] ss:$2 sm:$0xff]
        %s816 = scalar_lea.vmem [#allocation2], 1
        %v817 = vld [vmem:[%s816] ss:$2 sm:$0xff]
        %s818 = scalar_lea.vmem [#allocation2], 17
        %v819 = vld [vmem:[%s818] ss:$2 sm:$0xff]
        %s820 = scalar_lea.vmem [#allocation2], 33
        %v821 = vld [vmem:[%s820] ss:$2 sm:$0xff]
        %s822 = scalar_lea.vmem [#allocation2], 49
        %v823 = vld [vmem:[%s822] ss:$2 sm:$0xff]
        %s824 = scalar_lea.vmem [#allocation2], 65
        %v825 = vld [vmem:[%s824] ss:$2 sm:$0xff]
        %s826 = scalar_lea.vmem [#allocation2], 81
        %v827 = vld [vmem:[%s826] ss:$2 sm:$0xff]
        %s828 = scalar_lea.vmem [#allocation2], 97
        %v829 = vld [vmem:[%s828] ss:$2 sm:$0xff]
        %s830 = scalar_lea.vmem [#allocation2], 113
        %v831 = vld [vmem:[%s830] ss:$2 sm:$0xff]
        %v832 = vmax.f32 %v801, %v817
        %v833 = vmax.f32 %v803, %v819
        %v834 = vmax.f32 %v805, %v821
        %v835 = vmax.f32 %v807, %v823
        %v836 = vmax.f32 %v809, %v825
        %v837 = vmax.f32 %v811, %v827
        %v838 = vmax.f32 %v813, %v829
        %v839 = vmax.f32 %v815, %v831
        %840 = vst.msk [vmem:[#allocation3 + $0x1] sm:$0xff] %vm784, %v832
        %841 = vst.msk [vmem:[#allocation3 + $0x9] sm:$0xff] %vm784, %v833
        %842 = vst.msk [vmem:[#allocation3 + $0x13] sm:$0xff] %vm784, %v834
        %843 = vst.msk [vmem:[#allocation3 + $0x1b] sm:$0xff] %vm784, %v835
        %844 = vst.msk [vmem:[#allocation3 + $0x25] sm:$0xff] %vm784, %v836
        %845 = vst.msk [vmem:[#allocation3 + $0x2d] sm:$0xff] %vm784, %v837
        %846 = vst.msk [vmem:[#allocation3 + $0x37] sm:$0xff] %vm784, %v838
        %847 = vst.msk [vmem:[#allocation3 + $0x3f] sm:$0xff] %vm784, %v839
        %vm848 = vcmask 253952
        %849 = vst.msk [vmem:[#allocation3] sm:$0x1] %vm848, 0.0
        %vm850 = vcmask 254976
        %851 = vst.msk [vmem:[#allocation3 + $0x11] sm:$0x3] %vm850, 0.0
        %852 = vst.msk [vmem:[#allocation3 + $0x23] sm:$0x3] %vm850, 0.0
        %853 = vst.msk [vmem:[#allocation3 + $0x35] sm:$0x3] %vm850, 0.0
        %854 = vst.msk [vmem:[#allocation3 + $0x47] sm:$0x1] %vm848, 0.0
        %v855 = vld [vmem:[#allocation3] sm:$0xff]
        %v856 = vld [vmem:[#allocation3 + $0x8] sm:$0xff]
        %v857 = vld [vmem:[#allocation3 + $0x10] sm:$0xff]
        %v858 = vld [vmem:[#allocation3 + $0x18] sm:$0xff]
        %v859 = vld [vmem:[#allocation3 + $0x20] sm:$0xff]
        %v860 = vld [vmem:[#allocation3 + $0x28] sm:$0xff]
        %v861 = vld [vmem:[#allocation3 + $0x30] sm:$0xff]
        %v862 = vld [vmem:[#allocation3 + $0x38] sm:$0xff]
        %v863 = vld [vmem:[#allocation3 + $0x40] sm:$0x3f]
        %v864 = vpack.c.bf16 %v856, %v855
        %v865 = vpack.c.bf16 %v858, %v857
        %v866 = vpack.c.bf16 %v860, %v859
        %v867 = vpack.c.bf16 %v862, %v861
        %v868 = vpack.c.bf16 %v863, %v863
        %v869 = vld [vmem:[#allocation7] sm:$0xf]
        %v870 = vld [vmem:[#allocation7 + $0x4] sm:$0xf]
        %v871 = vld [vmem:[#allocation7 + $0x8] sm:$0xf]
        %v872 = vld [vmem:[#allocation7 + $0xc] sm:$0xf]
        %v873 = vld [vmem:[#allocation3 + $0x1] sm:$0xff]
        %v874 = vld [vmem:[#allocation3 + $0x9] sm:$0xff]
        %v875 = vld [vmem:[#allocation3 + $0x11] sm:$0xff]
        %v876 = vld [vmem:[#allocation3 + $0x19] sm:$0xff]
        %v877 = vld [vmem:[#allocation3 + $0x21] sm:$0xff]
        %v878 = vld [vmem:[#allocation3 + $0x29] sm:$0xff]
        %v879 = vld [vmem:[#allocation3 + $0x31] sm:$0xff]
        %v880 = vld [vmem:[#allocation3 + $0x39] sm:$0xff]
        %v881 = vld [vmem:[#allocation3 + $0x41] sm:$0x3f]
        %v882 = vpack.c.bf16 %v874, %v873
        %v883 = vpack.c.bf16 %v876, %v875
        %v884 = vpack.c.bf16 %v878, %v877
        %v885 = vpack.c.bf16 %v880, %v879
        %v886 = vpack.c.bf16 %v881, %v881
        %s887 = scalar_lea.vmem [#allocation7], 16
        %v888 = vld [vmem:[%s887] sm:$0xf]
        %v889 = vld [vmem:[%s887 + $0x4] sm:$0xf]
        %v890 = vld [vmem:[%s887 + $0x8] sm:$0xf]
        %v891 = vld [vmem:[%s887 + $0xc] sm:$0xf]
        %v896 = vunpack.c.l.b16 %v888
        %v897 = vunpack.c.l.b16 %v889
        %v898 = vunpack.c.l.b16 %v890
        %v899 = vunpack.c.l.b16 %v891
        %v900 = vpack.c.b16 %v897, %v896
        %v901 = vpack.c.b16 %v899, %v898
        %v905 = vsel %vm784, %v882, 0
        %v908 = vsel %vm784, %v883, 0
        %v911 = vsel %vm784, %v884, 0
        %v914 = vsel %vm784, %v885, 0
        %v917 = vsel %vm784, %v886, 0
        %919 = vmatprep.subr.bf16.mxu0 0
        %920 = vmatpush1.bf16.msra.mxu0 0
        %921 = vmatprep.subr.bf16.mxu0 0
        %922 = vmatpush1.bf16.msra.mxu0 0
        %923 = vmatprep.subr.bf16.mxu0 0
        %924 = vmatpush1.bf16.msra.mxu0 0
        %925 = vmatprep.subr.bf16.mxu0 0
        %926 = vmatpush1.bf16.msra.mxu0 0
        %927 = vmatprep.subr.bf16.mxu0 0
        %928 = vmatpush1.bf16.msra.mxu0 0
        %929 = vmatprep.subr.bf16.mxu0 0
        %930 = vmatpush1.bf16.msra.mxu0 0
        %931 = vmatprep.subr.bf16.mxu0 0
        %932 = vmatpush1.bf16.msra.mxu0 %v901
        %933 = vmatprep.subr.bf16.mxu0 0
        %934 = vmatpush1.bf16.msra.mxu0 %v900
        %935 = vmatprep.subr.bf16.mxu0 0
        %936 = vmatpush2.bf16.msra.mxu0 0
        %937 = vmatprep.subr.bf16.mxu0 0
        %938 = vmatpush2.bf16.msra.mxu0 0
        %939 = vmatprep.subr.bf16.mxu0 0
        %940 = vmatpush2.bf16.msra.mxu0 0
        %941 = vmatprep.subr.bf16.mxu0 0
        %942 = vmatpush2.bf16.msra.mxu0 0
        %943 = vmatprep.subr.bf16.mxu0 0
        %944 = vmatpush2.bf16.msra.mxu0 0
        %945 = vmatprep.subr.bf16.mxu0 0
        %946 = vmatpush2.bf16.msra.mxu0 0
        %947 = vmatprep.subr.bf16.mxu0 0
        %948 = vmatpush2.bf16.msra.mxu0 0
        %949 = vmatprep.subr.bf16.mxu0 0
        %950 = vmatpush2.bf16.msra.mxu0 0
        %951 = vmatprep.mubr.bf16.mxu0 0
        %952 = vmatmul.mubr.bf16.gmra.mxu0 %v905
        %v953 = vpop.f32.mrf.mxu0
        %v954 = vadd.f32 0.0, %v953
        %v955 = vpop.f32.mrf.mxu0
        %v956 = vpop.f32.mrf.mxu0
        %v957 = vadd.f32 0.0, %v956
        %v958 = vpop.f32.mrf.mxu0
        %959 = vmatprep.mubr.bf16.mxu0 0
        %960 = vmatmul.mubr.bf16.gmra.mxu0 %v908
        %v961 = vpop.f32.mrf.mxu0
        %v962 = vadd.f32 0.0, %v961
        %v963 = vpop.f32.mrf.mxu0
        %v964 = vpop.f32.mrf.mxu0
        %v965 = vadd.f32 0.0, %v964
        %v966 = vpop.f32.mrf.mxu0
        %967 = vmatprep.mubr.bf16.mxu0 0
        %968 = vmatmul.mubr.bf16.gmra.mxu0 %v911
        %v969 = vpop.f32.mrf.mxu0
        %v970 = vadd.f32 0.0, %v969
        %v971 = vpop.f32.mrf.mxu0
        %v972 = vpop.f32.mrf.mxu0
        %v973 = vadd.f32 0.0, %v972
        %v974 = vpop.f32.mrf.mxu0
        %975 = vmatprep.mubr.bf16.mxu0 0
        %976 = vmatmul.mubr.bf16.gmra.mxu0 %v914
        %v977 = vpop.f32.mrf.mxu0
        %v978 = vadd.f32 0.0, %v977
        %v979 = vpop.f32.mrf.mxu0
        %v980 = vpop.f32.mrf.mxu0
        %v981 = vadd.f32 0.0, %v980
        %v982 = vpop.f32.mrf.mxu0
        %983 = vmatprep.mubr.bf16.mxu0 0
        %984 = vmatmul.mubr.bf16.gmra.mxu0 %v917
        %v985 = vpop.f32.mrf.mxu0
        %v986 = vadd.f32 0.0, %v985
        %v987 = vpop.f32.mrf.mxu0
        %v988 = vpop.f32.mrf.mxu0
        %v989 = vpop.f32.mrf.mxu0
        %990 = vdwg.mxu0
        %v995 = vunpack.c.l.b16 %v869
        %v996 = vunpack.c.l.b16 %v870
        %v997 = vunpack.c.l.b16 %v871
        %v998 = vunpack.c.l.b16 %v872
        %v999 = vpack.c.b16 %v996, %v995
        %v1000 = vpack.c.b16 %v998, %v997
        %v1004 = vsel %vm784, %v864, 0
        %v1007 = vsel %vm784, %v865, 0
        %v1010 = vsel %vm784, %v866, 0
        %v1013 = vsel %vm784, %v867, 0
        %v1016 = vsel %vm784, %v868, 0
        %1018 = vmatprep.subr.bf16.mxu0 0
        %1019 = vmatpush1.bf16.msra.mxu0 0
        %1020 = vmatprep.subr.bf16.mxu0 0
        %1021 = vmatpush1.bf16.msra.mxu0 0
        %1022 = vmatprep.subr.bf16.mxu0 0
        %1023 = vmatpush1.bf16.msra.mxu0 0
        %1024 = vmatprep.subr.bf16.mxu0 0
        %1025 = vmatpush1.bf16.msra.mxu0 0
        %1026 = vmatprep.subr.bf16.mxu0 0
        %1027 = vmatpush1.bf16.msra.mxu0 0
        %1028 = vmatprep.subr.bf16.mxu0 0
        %1029 = vmatpush1.bf16.msra.mxu0 0
        %1030 = vmatprep.subr.bf16.mxu0 0
        %1031 = vmatpush1.bf16.msra.mxu0 %v1000
        %1032 = vmatprep.subr.bf16.mxu0 0
        %1033 = vmatpush1.bf16.msra.mxu0 %v999
        %1034 = vmatprep.subr.bf16.mxu0 0
        %1035 = vmatpush2.bf16.msra.mxu0 0
        %1036 = vmatprep.subr.bf16.mxu0 0
        %1037 = vmatpush2.bf16.msra.mxu0 0
        %1038 = vmatprep.subr.bf16.mxu0 0
        %1039 = vmatpush2.bf16.msra.mxu0 0
        %1040 = vmatprep.subr.bf16.mxu0 0
        %1041 = vmatpush2.bf16.msra.mxu0 0
        %1042 = vmatprep.subr.bf16.mxu0 0
        %1043 = vmatpush2.bf16.msra.mxu0 0
        %1044 = vmatprep.subr.bf16.mxu0 0
        %1045 = vmatpush2.bf16.msra.mxu0 0
        %1046 = vmatprep.subr.bf16.mxu0 0
        %1047 = vmatpush2.bf16.msra.mxu0 0
        %1048 = vmatprep.subr.bf16.mxu0 0
        %1049 = vmatpush2.bf16.msra.mxu0 0
        %1050 = vmatprep.mubr.bf16.mxu0 0
        %1051 = vmatmul.mubr.bf16.gmra.mxu0 %v1004
        %v1052 = vpop.f32.mrf.mxu0
        %v1053 = vadd.f32 %v954, %v1052
        %v1054 = vpop.f32.mrf.mxu0
        %v1055 = vpop.f32.mrf.mxu0
        %v1056 = vadd.f32 %v957, %v1055
        %v1057 = vpop.f32.mrf.mxu0
        %1058 = vmatprep.mubr.bf16.mxu0 0
        %1059 = vmatmul.mubr.bf16.gmra.mxu0 %v1007
        %v1060 = vpop.f32.mrf.mxu0
        %v1061 = vadd.f32 %v962, %v1060
        %v1062 = vpop.f32.mrf.mxu0
        %v1063 = vpop.f32.mrf.mxu0
        %v1064 = vadd.f32 %v965, %v1063
        %v1065 = vpop.f32.mrf.mxu0
        %1066 = vmatprep.mubr.bf16.mxu0 0
        %1067 = vmatmul.mubr.bf16.gmra.mxu0 %v1010
        %v1068 = vpop.f32.mrf.mxu0
        %v1069 = vadd.f32 %v970, %v1068
        %v1070 = vpop.f32.mrf.mxu0
        %v1071 = vpop.f32.mrf.mxu0
        %v1072 = vadd.f32 %v973, %v1071
        %v1073 = vpop.f32.mrf.mxu0
        %1074 = vmatprep.mubr.bf16.mxu0 0
        %1075 = vmatmul.mubr.bf16.gmra.mxu0 %v1013
        %v1076 = vpop.f32.mrf.mxu0
        %v1077 = vadd.f32 %v978, %v1076
        %v1078 = vpop.f32.mrf.mxu0
        %v1079 = vpop.f32.mrf.mxu0
        %v1080 = vadd.f32 %v981, %v1079
        %v1081 = vpop.f32.mrf.mxu0
        %1082 = vmatprep.mubr.bf16.mxu0 0
        %1083 = vmatmul.mubr.bf16.gmra.mxu0 %v1016
        %v1084 = vpop.f32.mrf.mxu0
        %v1085 = vadd.f32 %v986, %v1084
        %v1086 = vpop.f32.mrf.mxu0
        %v1087 = vpop.f32.mrf.mxu0
        %v1088 = vpop.f32.mrf.mxu0
        %1089 = vdwg.mxu0
        %v1090 = vld [vmem:[#allocation3 + $0x2] sm:$0xff]
        %v1091 = vld [vmem:[#allocation3 + $0xa] sm:$0xff]
        %v1092 = vld [vmem:[#allocation3 + $0x12] sm:$0xff]
        %v1093 = vld [vmem:[#allocation3 + $0x1a] sm:$0xff]
        %v1094 = vld [vmem:[#allocation3 + $0x22] sm:$0xff]
        %v1095 = vld [vmem:[#allocation3 + $0x2a] sm:$0xff]
        %v1096 = vld [vmem:[#allocation3 + $0x32] sm:$0xff]
        %v1097 = vld [vmem:[#allocation3 + $0x3a] sm:$0xff]
        %v1098 = vld [vmem:[#allocation3 + $0x42] sm:$0x3f]
        %v1099 = vpack.c.bf16 %v1091, %v1090
        %v1100 = vpack.c.bf16 %v1093, %v1092
        %v1101 = vpack.c.bf16 %v1095, %v1094
        %v1102 = vpack.c.bf16 %v1097, %v1096
        %v1103 = vpack.c.bf16 %v1098, %v1098
        %s1104 = scalar_lea.vmem [#allocation7], 32
        %v1105 = vld [vmem:[%s1104] sm:$0xf]
        %v1106 = vld [vmem:[%s1104 + $0x4] sm:$0xf]
        %v1107 = vld [vmem:[%s1104 + $0x8] sm:$0xf]
        %v1108 = vld [vmem:[%s1104 + $0xc] sm:$0xf]
        %v1113 = vunpack.c.l.b16 %v1105
        %v1114 = vunpack.c.l.b16 %v1106
        %v1115 = vunpack.c.l.b16 %v1107
        %v1116 = vunpack.c.l.b16 %v1108
        %v1117 = vpack.c.b16 %v1114, %v1113
        %v1118 = vpack.c.b16 %v1116, %v1115
        %v1122 = vsel %vm784, %v1099, 0
        %v1125 = vsel %vm784, %v1100, 0
        %v1128 = vsel %vm784, %v1101, 0
        %v1131 = vsel %vm784, %v1102, 0
        %v1134 = vsel %vm784, %v1103, 0
        %1136 = vmatprep.subr.bf16.mxu0 0
        %1137 = vmatpush1.bf16.msra.mxu0 0
        %1138 = vmatprep.subr.bf16.mxu0 0
        %1139 = vmatpush1.bf16.msra.mxu0 0
        %1140 = vmatprep.subr.bf16.mxu0 0
        %1141 = vmatpush1.bf16.msra.mxu0 0
        %1142 = vmatprep.subr.bf16.mxu0 0
        %1143 = vmatpush1.bf16.msra.mxu0 0
        %1144 = vmatprep.subr.bf16.mxu0 0
        %1145 = vmatpush1.bf16.msra.mxu0 0
        %1146 = vmatprep.subr.bf16.mxu0 0
        %1147 = vmatpush1.bf16.msra.mxu0 0
        %1148 = vmatprep.subr.bf16.mxu0 0
        %1149 = vmatpush1.bf16.msra.mxu0 %v1118
        %1150 = vmatprep.subr.bf16.mxu0 0
        %1151 = vmatpush1.bf16.msra.mxu0 %v1117
        %1152 = vmatprep.subr.bf16.mxu0 0
        %1153 = vmatpush2.bf16.msra.mxu0 0
        %1154 = vmatprep.subr.bf16.mxu0 0
        %1155 = vmatpush2.bf16.msra.mxu0 0
        %1156 = vmatprep.subr.bf16.mxu0 0
        %1157 = vmatpush2.bf16.msra.mxu0 0
        %1158 = vmatprep.subr.bf16.mxu0 0
        %1159 = vmatpush2.bf16.msra.mxu0 0
        %1160 = vmatprep.subr.bf16.mxu0 0
        %1161 = vmatpush2.bf16.msra.mxu0 0
        %1162 = vmatprep.subr.bf16.mxu0 0
        %1163 = vmatpush2.bf16.msra.mxu0 0
        %1164 = vmatprep.subr.bf16.mxu0 0
        %1165 = vmatpush2.bf16.msra.mxu0 0
        %1166 = vmatprep.subr.bf16.mxu0 0
        %1167 = vmatpush2.bf16.msra.mxu0 0
        %1168 = vmatprep.mubr.bf16.mxu0 0
        %1169 = vmatmul.mubr.bf16.gmra.mxu0 %v1122
        %v1170 = vpop.f32.mrf.mxu0
        %v1171 = vadd.f32 0.0, %v1170
        %v1172 = vpop.f32.mrf.mxu0
        %v1173 = vpop.f32.mrf.mxu0
        %v1174 = vadd.f32 0.0, %v1173
        %v1175 = vpop.f32.mrf.mxu0
        %1176 = vmatprep.mubr.bf16.mxu0 0
        %1177 = vmatmul.mubr.bf16.gmra.mxu0 %v1125
        %v1178 = vpop.f32.mrf.mxu0
        %v1179 = vadd.f32 0.0, %v1178
        %v1180 = vpop.f32.mrf.mxu0
        %v1181 = vpop.f32.mrf.mxu0
        %v1182 = vadd.f32 0.0, %v1181
        %v1183 = vpop.f32.mrf.mxu0
        %1184 = vmatprep.mubr.bf16.mxu0 0
        %1185 = vmatmul.mubr.bf16.gmra.mxu0 %v1128
        %v1186 = vpop.f32.mrf.mxu0
        %v1187 = vadd.f32 0.0, %v1186
        %v1188 = vpop.f32.mrf.mxu0
        %v1189 = vpop.f32.mrf.mxu0
        %v1190 = vadd.f32 0.0, %v1189
        %v1191 = vpop.f32.mrf.mxu0
        %1192 = vmatprep.mubr.bf16.mxu0 0
        %1193 = vmatmul.mubr.bf16.gmra.mxu0 %v1131
        %v1194 = vpop.f32.mrf.mxu0
        %v1195 = vadd.f32 0.0, %v1194
        %v1196 = vpop.f32.mrf.mxu0
        %v1197 = vpop.f32.mrf.mxu0
        %v1198 = vadd.f32 0.0, %v1197
        %v1199 = vpop.f32.mrf.mxu0
        %1200 = vmatprep.mubr.bf16.mxu0 0
        %1201 = vmatmul.mubr.bf16.gmra.mxu0 %v1134
        %v1202 = vpop.f32.mrf.mxu0
        %v1203 = vadd.f32 0.0, %v1202
        %v1204 = vpop.f32.mrf.mxu0
        %v1205 = vpop.f32.mrf.mxu0
        %v1206 = vpop.f32.mrf.mxu0
        %1207 = vdwg.mxu0
        %v1208 = vadd.f32 %v1053, %v1171
        %v1209 = vadd.f32 %v1056, %v1174
        %v1210 = vadd.f32 %v1061, %v1179
        %v1211 = vadd.f32 %v1064, %v1182
        %v1212 = vadd.f32 %v1069, %v1187
        %v1213 = vadd.f32 %v1072, %v1190
        %v1214 = vadd.f32 %v1077, %v1195
        %v1215 = vadd.f32 %v1080, %v1198
        %v1216 = vadd.f32 %v1085, %v1203
        %v1217 = vld [vmem:[%s5] sm:$0x1]
        %v1219 = vlaneseq
        %v1220 = vshrl.u32 %v1219, 7
        %v1221 = vsub.s32 0, %v1220
        %v1222 = vrot.slane %v1217, %v1221
        %v1224 = vmul.f32 %v1208, %v1222
        %v1225 = vmul.f32 %v1209, %v1222
        %v1226 = vmul.f32 %v1210, %v1222
        %v1227 = vmul.f32 %v1211, %v1222
        %v1228 = vmul.f32 %v1212, %v1222
        %v1229 = vmul.f32 %v1213, %v1222
        %v1230 = vmul.f32 %v1214, %v1222
        %v1231 = vmul.f32 %v1215, %v1222
        %v1232 = vmul.f32 %v1216, %v1222
        %v1233 = vld [vmem:[%s6] sm:$0x1]
        %v1235 = vlaneseq
        %v1236 = vshrl.u32 %v1235, 7
        %v1237 = vsub.s32 0, %v1236
        %v1238 = vrot.slane %v1233, %v1237
        %v1240 = vadd.f32 %v1224, %v1238
        %v1241 = vadd.f32 %v1225, %v1238
        %v1242 = vadd.f32 %v1226, %v1238
        %v1243 = vadd.f32 %v1227, %v1238
        %v1244 = vadd.f32 %v1228, %v1238
        %v1245 = vadd.f32 %v1229, %v1238
        %v1246 = vadd.f32 %v1230, %v1238
        %v1247 = vadd.f32 %v1231, %v1238
        %v1248 = vadd.f32 %v1232, %v1238
        %v1249 = vmax.f32 %v1240, 0.0
        %v1250 = vmax.f32 %v1241, 0.0
        %v1251 = vmax.f32 %v1242, 0.0
        %v1252 = vmax.f32 %v1243, 0.0
        %v1253 = vmax.f32 %v1244, 0.0
        %v1254 = vmax.f32 %v1245, 0.0
        %v1255 = vmax.f32 %v1246, 0.0
        %v1256 = vmax.f32 %v1247, 0.0
        %v1257 = vmax.f32 %v1248, 0.0
        %vm1258 = vcmask 523264
        %1259 = vst.msk [vmem:[#allocation4] sm:$0xff] %vm1258, %v1249
        %1260 = vst.msk [vmem:[#allocation4 + $0x8] sm:$0xff] %vm1258, %v1250
        %1261 = vst.msk [vmem:[#allocation4 + $0x10] sm:$0xff] %vm1258, %v1251
        %1262 = vst.msk [vmem:[#allocation4 + $0x18] sm:$0xff] %vm1258, %v1252
        %1263 = vst.msk [vmem:[#allocation4 + $0x20] sm:$0xff] %vm1258, %v1253
        %1264 = vst.msk [vmem:[#allocation4 + $0x28] sm:$0xff] %vm1258, %v1254
        %1265 = vst.msk [vmem:[#allocation4 + $0x30] sm:$0xff] %vm1258, %v1255
        %1266 = vst.msk [vmem:[#allocation4 + $0x38] sm:$0xff] %vm1258, %v1256
        %vm1267 = vcmask 521216
        %1268 = vst.msk [vmem:[#allocation4 + $0x40] sm:$0x3f] %vm1267, %v1257
        %v1269 = vld [vmem:[#allocation4] ss:$2 sm:$0xff]
        %s1270 = scalar_lea.vmem [#allocation4], 16
        %v1271 = vld [vmem:[%s1270] ss:$2 sm:$0xff]
        %s1272 = scalar_lea.vmem [#allocation4], 32
        %v1273 = vld [vmem:[%s1272] ss:$2 sm:$0xff]
        %s1274 = scalar_lea.vmem [#allocation4], 48
        %v1275 = vld [vmem:[%s1274] ss:$2 sm:$0xff]
        %s1276 = scalar_lea.vmem [#allocation4], 64
        %v1277 = vld [vmem:[%s1276] ss:$2 sm:$0x7]
        %s1278 = scalar_lea.vmem [#allocation4], 1
        %v1279 = vld [vmem:[%s1278] ss:$2 sm:$0xff]
        %s1280 = scalar_lea.vmem [#allocation4], 17
        %v1281 = vld [vmem:[%s1280] ss:$2 sm:$0xff]
        %s1282 = scalar_lea.vmem [#allocation4], 33
        %v1283 = vld [vmem:[%s1282] ss:$2 sm:$0xff]
        %s1284 = scalar_lea.vmem [#allocation4], 49
        %v1285 = vld [vmem:[%s1284] ss:$2 sm:$0xff]
        %s1286 = scalar_lea.vmem [#allocation4], 65
        %v1287 = vld [vmem:[%s1286] ss:$2 sm:$0x7]
        %v1288 = vmax.f32 %v1269, %v1279
        %v1289 = vmax.f32 %v1271, %v1281
        %v1290 = vmax.f32 %v1273, %v1283
        %v1291 = vmax.f32 %v1275, %v1285
        %v1292 = vmax.f32 %v1277, %v1287
        %1293 = vst.msk [vmem:[#allocation5 + $0x1] sm:$0xff] %vm1258, %v1288
        %vm1294 = vcmask 523265
        %1295 = vst.msk [vmem:[#allocation5 + $0xa] sm:$0xfe] %vm1294, %v1289
        %vm1296 = vcmask 516096
        %1297 = vst.msk [vmem:[#allocation5 + $0x12] sm:$0x1] %vm1296, %v1290
        %vm1298 = vcmask 523266
        %1299 = vst.msk [vmem:[#allocation5 + $0x13] sm:$0xfc] %vm1298, %v1290
        %vm1300 = vcmask 517120
        %1301 = vst.msk [vmem:[#allocation5 + $0x1b] sm:$0x3] %vm1300, %v1291
        %vm1302 = vcmask 523267
        %1303 = vst.msk [vmem:[#allocation5 + $0x1c] sm:$0xf8] %vm1302, %v1291
        %vm1304 = vcmask 518144
        %1305 = vst.msk [vmem:[#allocation5 + $0x24] sm:$0x7] %vm1304, %v1292
        %1306 = vst.msk [vmem:[#allocation5] sm:$0x1] %vm1296, 0.0
        %1307 = vst.msk [vmem:[#allocation5 + $0x9] sm:$0x3] %vm1300, 0.0
        %1308 = vst.msk [vmem:[#allocation5 + $0x13] sm:$0x3] %vm1300, 0.0
        %1309 = vst.msk [vmem:[#allocation5 + $0x1d] sm:$0x3] %vm1300, 0.0
        %1310 = vst.msk [vmem:[#allocation5 + $0x27] sm:$0x1] %vm1296, 0.0
        %v1311 = vld [vmem:[#allocation5] sm:$0xff]
        %v1312 = vld [vmem:[#allocation5 + $0x8] sm:$0xff]
        %v1313 = vld [vmem:[#allocation5 + $0x10] sm:$0xff]
        %v1314 = vld [vmem:[#allocation5 + $0x18] sm:$0xff]
        %v1315 = vld [vmem:[#allocation5 + $0x20] sm:$0x3f]
        %v1316 = vpack.c.bf16 %v1312, %v1311
        %v1317 = vpack.c.bf16 %v1314, %v1313
        %v1318 = vpack.c.bf16 %v1315, %v1315
        %v1319 = vld [vmem:[%s7] sm:$0xf]
        %v1320 = vld [vmem:[%s7 + $0x4] sm:$0xf]
        %v1321 = vld [vmem:[%s7 + $0x8] sm:$0xf]
        %v1322 = vld [vmem:[%s7 + $0xc] sm:$0xf]
        %v1323 = vld [vmem:[%s7 + $0x10] sm:$0xf]
        %v1324 = vld [vmem:[%s7 + $0x14] sm:$0xf]
        %v1325 = vld [vmem:[%s7 + $0x18] sm:$0xf]
        %v1326 = vld [vmem:[%s7 + $0x1c] sm:$0xf]
        %v1327 = vld [vmem:[#allocation5 + $0x1] sm:$0xff]
        %v1328 = vld [vmem:[#allocation5 + $0x9] sm:$0xff]
        %v1329 = vld [vmem:[#allocation5 + $0x11] sm:$0xff]
        %v1330 = vld [vmem:[#allocation5 + $0x19] sm:$0xff]
        %v1331 = vld [vmem:[#allocation5 + $0x21] sm:$0x3f]
        %v1332 = vpack.c.bf16 %v1328, %v1327
        %v1333 = vpack.c.bf16 %v1330, %v1329
        %v1334 = vpack.c.bf16 %v1331, %v1331
        %s1335 = scalar_lea.vmem %s7, 32
        %v1336 = vld [vmem:[%s1335] sm:$0xf]
        %v1337 = vld [vmem:[%s1335 + $0x4] sm:$0xf]
        %v1338 = vld [vmem:[%s1335 + $0x8] sm:$0xf]
        %v1339 = vld [vmem:[%s1335 + $0xc] sm:$0xf]
        %v1340 = vld [vmem:[%s1335 + $0x10] sm:$0xf]
        %v1341 = vld [vmem:[%s1335 + $0x14] sm:$0xf]
        %v1342 = vld [vmem:[%s1335 + $0x18] sm:$0xf]
        %v1343 = vld [vmem:[%s1335 + $0x1c] sm:$0xf]
        %v1352 = vunpack.c.l.b16 %v1336
        %v1353 = vunpack.c.l.b16 %v1337
        %v1354 = vunpack.c.l.b16 %v1338
        %v1355 = vunpack.c.l.b16 %v1339
        %v1356 = vunpack.c.l.b16 %v1340
        %v1357 = vunpack.c.l.b16 %v1341
        %v1358 = vunpack.c.l.b16 %v1342
        %v1359 = vunpack.c.l.b16 %v1343
        %v1360 = vpack.c.b16 %v1353, %v1352
        %v1361 = vpack.c.b16 %v1355, %v1354
        %v1362 = vpack.c.b16 %v1357, %v1356
        %v1363 = vpack.c.b16 %v1359, %v1358
        %v1369 = vsel %vm1258, %v1332, 0
        %v1372 = vsel %vm1258, %v1333, 0
        %v1375 = vsel %vm1258, %v1334, 0
        %1377 = vmatprep.subr.bf16.mxu0 0
        %1378 = vmatpush1.bf16.msra.mxu0 0
        %1379 = vmatprep.subr.bf16.mxu0 0
        %1380 = vmatpush1.bf16.msra.mxu0 0
        %1381 = vmatprep.subr.bf16.mxu0 0
        %1382 = vmatpush1.bf16.msra.mxu0 0
        %1383 = vmatprep.subr.bf16.mxu0 0
        %1384 = vmatpush1.bf16.msra.mxu0 0
        %1385 = vmatprep.subr.bf16.mxu0 0
        %1386 = vmatpush1.bf16.msra.mxu0 %v1363
        %1387 = vmatprep.subr.bf16.mxu0 0
        %1388 = vmatpush1.bf16.msra.mxu0 %v1362
        %1389 = vmatprep.subr.bf16.mxu0 0
        %1390 = vmatpush1.bf16.msra.mxu0 %v1361
        %1391 = vmatprep.subr.bf16.mxu0 0
        %1392 = vmatpush1.bf16.msra.mxu0 %v1360
        %1393 = vmatprep.subr.bf16.mxu0 0
        %1394 = vmatpush2.bf16.msra.mxu0 0
        %1395 = vmatprep.subr.bf16.mxu0 0
        %1396 = vmatpush2.bf16.msra.mxu0 0
        %1397 = vmatprep.subr.bf16.mxu0 0
        %1398 = vmatpush2.bf16.msra.mxu0 0
        %1399 = vmatprep.subr.bf16.mxu0 0
        %1400 = vmatpush2.bf16.msra.mxu0 0
        %1401 = vmatprep.subr.bf16.mxu0 0
        %1402 = vmatpush2.bf16.msra.mxu0 0
        %1403 = vmatprep.subr.bf16.mxu0 0
        %1404 = vmatpush2.bf16.msra.mxu0 0
        %1405 = vmatprep.subr.bf16.mxu0 0
        %1406 = vmatpush2.bf16.msra.mxu0 0
        %1407 = vmatprep.subr.bf16.mxu0 0
        %1408 = vmatpush2.bf16.msra.mxu0 0
        %1409 = vmatprep.mubr.bf16.mxu0 0
        %1410 = vmatmul.mubr.bf16.gmra.mxu0 %v1369
        %v1411 = vpop.f32.mrf.mxu0
        %v1412 = vadd.f32 0.0, %v1411
        %v1413 = vpop.f32.mrf.mxu0
        %v1414 = vpop.f32.mrf.mxu0
        %v1415 = vadd.f32 0.0, %v1414
        %v1416 = vpop.f32.mrf.mxu0
        %1417 = vmatprep.mubr.bf16.mxu0 0
        %1418 = vmatmul.mubr.bf16.gmra.mxu0 %v1372
        %v1419 = vpop.f32.mrf.mxu0
        %v1420 = vadd.f32 0.0, %v1419
        %v1421 = vpop.f32.mrf.mxu0
        %v1422 = vpop.f32.mrf.mxu0
        %v1423 = vadd.f32 0.0, %v1422
        %v1424 = vpop.f32.mrf.mxu0
        %1425 = vmatprep.mubr.bf16.mxu0 0
        %1426 = vmatmul.mubr.bf16.gmra.mxu0 %v1375
        %v1427 = vpop.f32.mrf.mxu0
        %v1428 = vadd.f32 0.0, %v1427
        %v1429 = vpop.f32.mrf.mxu0
        %v1430 = vpop.f32.mrf.mxu0
        %v1431 = vpop.f32.mrf.mxu0
        %1432 = vdwg.mxu0
        %v1441 = vunpack.c.l.b16 %v1319
        %v1442 = vunpack.c.l.b16 %v1320
        %v1443 = vunpack.c.l.b16 %v1321
        %v1444 = vunpack.c.l.b16 %v1322
        %v1445 = vunpack.c.l.b16 %v1323
        %v1446 = vunpack.c.l.b16 %v1324
        %v1447 = vunpack.c.l.b16 %v1325
        %v1448 = vunpack.c.l.b16 %v1326
        %v1449 = vpack.c.b16 %v1442, %v1441
        %v1450 = vpack.c.b16 %v1444, %v1443
        %v1451 = vpack.c.b16 %v1446, %v1445
        %v1452 = vpack.c.b16 %v1448, %v1447
        %v1458 = vsel %vm1258, %v1316, 0
        %v1461 = vsel %vm1258, %v1317, 0
        %v1464 = vsel %vm1258, %v1318, 0
        %1466 = vmatprep.subr.bf16.mxu0 0
        %1467 = vmatpush1.bf16.msra.mxu0 0
        %1468 = vmatprep.subr.bf16.mxu0 0
        %1469 = vmatpush1.bf16.msra.mxu0 0
        %1470 = vmatprep.subr.bf16.mxu0 0
        %1471 = vmatpush1.bf16.msra.mxu0 0
        %1472 = vmatprep.subr.bf16.mxu0 0
        %1473 = vmatpush1.bf16.msra.mxu0 0
        %1474 = vmatprep.subr.bf16.mxu0 0
        %1475 = vmatpush1.bf16.msra.mxu0 %v1452
        %1476 = vmatprep.subr.bf16.mxu0 0
        %1477 = vmatpush1.bf16.msra.mxu0 %v1451
        %1478 = vmatprep.subr.bf16.mxu0 0
        %1479 = vmatpush1.bf16.msra.mxu0 %v1450
        %1480 = vmatprep.subr.bf16.mxu0 0
        %1481 = vmatpush1.bf16.msra.mxu0 %v1449
        %1482 = vmatprep.subr.bf16.mxu0 0
        %1483 = vmatpush2.bf16.msra.mxu0 0
        %1484 = vmatprep.subr.bf16.mxu0 0
        %1485 = vmatpush2.bf16.msra.mxu0 0
        %1486 = vmatprep.subr.bf16.mxu0 0
        %1487 = vmatpush2.bf16.msra.mxu0 0
        %1488 = vmatprep.subr.bf16.mxu0 0
        %1489 = vmatpush2.bf16.msra.mxu0 0
        %1490 = vmatprep.subr.bf16.mxu0 0
        %1491 = vmatpush2.bf16.msra.mxu0 0
        %1492 = vmatprep.subr.bf16.mxu0 0
        %1493 = vmatpush2.bf16.msra.mxu0 0
        %1494 = vmatprep.subr.bf16.mxu0 0
        %1495 = vmatpush2.bf16.msra.mxu0 0
        %1496 = vmatprep.subr.bf16.mxu0 0
        %1497 = vmatpush2.bf16.msra.mxu0 0
        %1498 = vmatprep.mubr.bf16.mxu0 0
        %1499 = vmatmul.mubr.bf16.gmra.mxu0 %v1458
        %v1500 = vpop.f32.mrf.mxu0
        %v1501 = vadd.f32 %v1412, %v1500
        %v1502 = vpop.f32.mrf.mxu0
        %v1503 = vpop.f32.mrf.mxu0
        %v1504 = vadd.f32 %v1415, %v1503
        %v1505 = vpop.f32.mrf.mxu0
        %1506 = vmatprep.mubr.bf16.mxu0 0
        %1507 = vmatmul.mubr.bf16.gmra.mxu0 %v1461
        %v1508 = vpop.f32.mrf.mxu0
        %v1509 = vadd.f32 %v1420, %v1508
        %v1510 = vpop.f32.mrf.mxu0
        %v1511 = vpop.f32.mrf.mxu0
        %v1512 = vadd.f32 %v1423, %v1511
        %v1513 = vpop.f32.mrf.mxu0
        %1514 = vmatprep.mubr.bf16.mxu0 0
        %1515 = vmatmul.mubr.bf16.gmra.mxu0 %v1464
        %v1516 = vpop.f32.mrf.mxu0
        %v1517 = vadd.f32 %v1428, %v1516
        %v1518 = vpop.f32.mrf.mxu0
        %v1519 = vpop.f32.mrf.mxu0
        %v1520 = vpop.f32.mrf.mxu0
        %1521 = vdwg.mxu0
        %v1522 = vld [vmem:[#allocation5 + $0x2] sm:$0xff]
        %v1523 = vld [vmem:[#allocation5 + $0xa] sm:$0xff]
        %v1524 = vld [vmem:[#allocation5 + $0x12] sm:$0xff]
        %v1525 = vld [vmem:[#allocation5 + $0x1a] sm:$0xff]
        %v1526 = vld [vmem:[#allocation5 + $0x22] sm:$0x3f]
        %v1527 = vpack.c.bf16 %v1523, %v1522
        %v1528 = vpack.c.bf16 %v1525, %v1524
        %v1529 = vpack.c.bf16 %v1526, %v1526
        %s1530 = scalar_lea.vmem %s7, 64
        %v1531 = vld [vmem:[%s1530] sm:$0xf]
        %v1532 = vld [vmem:[%s1530 + $0x4] sm:$0xf]
        %v1533 = vld [vmem:[%s1530 + $0x8] sm:$0xf]
        %v1534 = vld [vmem:[%s1530 + $0xc] sm:$0xf]
        %v1535 = vld [vmem:[%s1530 + $0x10] sm:$0xf]
        %v1536 = vld [vmem:[%s1530 + $0x14] sm:$0xf]
        %v1537 = vld [vmem:[%s1530 + $0x18] sm:$0xf]
        %v1538 = vld [vmem:[%s1530 + $0x1c] sm:$0xf]
        %v1547 = vunpack.c.l.b16 %v1531
        %v1548 = vunpack.c.l.b16 %v1532
        %v1549 = vunpack.c.l.b16 %v1533
        %v1550 = vunpack.c.l.b16 %v1534
        %v1551 = vunpack.c.l.b16 %v1535
        %v1552 = vunpack.c.l.b16 %v1536
        %v1553 = vunpack.c.l.b16 %v1537
        %v1554 = vunpack.c.l.b16 %v1538
        %v1555 = vpack.c.b16 %v1548, %v1547
        %v1556 = vpack.c.b16 %v1550, %v1549
        %v1557 = vpack.c.b16 %v1552, %v1551
        %v1558 = vpack.c.b16 %v1554, %v1553
        %v1564 = vsel %vm1258, %v1527, 0
        %v1567 = vsel %vm1258, %v1528, 0
        %v1570 = vsel %vm1258, %v1529, 0
        %1572 = vmatprep.subr.bf16.mxu0 0
        %1573 = vmatpush1.bf16.msra.mxu0 0
        %1574 = vmatprep.subr.bf16.mxu0 0
        %1575 = vmatpush1.bf16.msra.mxu0 0
        %1576 = vmatprep.subr.bf16.mxu0 0
        %1577 = vmatpush1.bf16.msra.mxu0 0
        %1578 = vmatprep.subr.bf16.mxu0 0
        %1579 = vmatpush1.bf16.msra.mxu0 0
        %1580 = vmatprep.subr.bf16.mxu0 0
        %1581 = vmatpush1.bf16.msra.mxu0 %v1558
        %1582 = vmatprep.subr.bf16.mxu0 0
        %1583 = vmatpush1.bf16.msra.mxu0 %v1557
        %1584 = vmatprep.subr.bf16.mxu0 0
        %1585 = vmatpush1.bf16.msra.mxu0 %v1556
        %1586 = vmatprep.subr.bf16.mxu0 0
        %1587 = vmatpush1.bf16.msra.mxu0 %v1555
        %1588 = vmatprep.subr.bf16.mxu0 0
        %1589 = vmatpush2.bf16.msra.mxu0 0
        %1590 = vmatprep.subr.bf16.mxu0 0
        %1591 = vmatpush2.bf16.msra.mxu0 0
        %1592 = vmatprep.subr.bf16.mxu0 0
        %1593 = vmatpush2.bf16.msra.mxu0 0
        %1594 = vmatprep.subr.bf16.mxu0 0
        %1595 = vmatpush2.bf16.msra.mxu0 0
        %1596 = vmatprep.subr.bf16.mxu0 0
        %1597 = vmatpush2.bf16.msra.mxu0 0
        %1598 = vmatprep.subr.bf16.mxu0 0
        %1599 = vmatpush2.bf16.msra.mxu0 0
        %1600 = vmatprep.subr.bf16.mxu0 0
        %1601 = vmatpush2.bf16.msra.mxu0 0
        %1602 = vmatprep.subr.bf16.mxu0 0
        %1603 = vmatpush2.bf16.msra.mxu0 0
        %1604 = vmatprep.mubr.bf16.mxu0 0
        %1605 = vmatmul.mubr.bf16.gmra.mxu0 %v1564
        %v1606 = vpop.f32.mrf.mxu0
        %v1607 = vadd.f32 0.0, %v1606
        %v1608 = vpop.f32.mrf.mxu0
        %v1609 = vpop.f32.mrf.mxu0
        %v1610 = vadd.f32 0.0, %v1609
        %v1611 = vpop.f32.mrf.mxu0
        %1612 = vmatprep.mubr.bf16.mxu0 0
        %1613 = vmatmul.mubr.bf16.gmra.mxu0 %v1567
        %v1614 = vpop.f32.mrf.mxu0
        %v1615 = vadd.f32 0.0, %v1614
        %v1616 = vpop.f32.mrf.mxu0
        %v1617 = vpop.f32.mrf.mxu0
        %v1618 = vadd.f32 0.0, %v1617
        %v1619 = vpop.f32.mrf.mxu0
        %1620 = vmatprep.mubr.bf16.mxu0 0
        %1621 = vmatmul.mubr.bf16.gmra.mxu0 %v1570
        %v1622 = vpop.f32.mrf.mxu0
        %v1623 = vadd.f32 0.0, %v1622
        %v1624 = vpop.f32.mrf.mxu0
        %v1625 = vpop.f32.mrf.mxu0
        %v1626 = vpop.f32.mrf.mxu0
        %1627 = vdwg.mxu0
        %v1628 = vadd.f32 %v1501, %v1607
        %v1629 = vadd.f32 %v1504, %v1610
        %v1630 = vadd.f32 %v1509, %v1615
        %v1631 = vadd.f32 %v1512, %v1618
        %v1632 = vadd.f32 %v1517, %v1623
        %v1633 = vld [vmem:[%s8] sm:$0x1]
        %v1635 = vlaneseq
        %v1636 = vshrl.u32 %v1635, 7
        %v1637 = vsub.s32 0, %v1636
        %v1638 = vrot.slane %v1633, %v1637
        %v1640 = vmul.f32 %v1628, %v1638
        %v1641 = vmul.f32 %v1629, %v1638
        %v1642 = vmul.f32 %v1630, %v1638
        %v1643 = vmul.f32 %v1631, %v1638
        %v1644 = vmul.f32 %v1632, %v1638
        %v1645 = vld [vmem:[%s9] sm:$0x1]
        %v1647 = vlaneseq
        %v1648 = vshrl.u32 %v1647, 7
        %v1649 = vsub.s32 0, %v1648
        %v1650 = vrot.slane %v1645, %v1649
        %v1652 = vadd.f32 %v1640, %v1650
        %v1653 = vadd.f32 %v1641, %v1650
        %v1654 = vadd.f32 %v1642, %v1650
        %v1655 = vadd.f32 %v1643, %v1650
        %v1656 = vadd.f32 %v1644, %v1650
        %v1657 = vmax.f32 %v1652, 0.0
        %v1658 = vmax.f32 %v1653, 0.0
        %v1659 = vmax.f32 %v1654, 0.0
        %v1660 = vmax.f32 %v1655, 0.0
        %v1661 = vmax.f32 %v1656, 0.0
        %1662 = vst [vmem:[#allocation6] sm:$0xff] %v1657
        %1663 = vst [vmem:[#allocation6 + $0x8] sm:$0xff] %v1658
        %1664 = vst [vmem:[#allocation6 + $0x10] sm:$0xff] %v1659
        %1665 = vst [vmem:[#allocation6 + $0x18] sm:$0xff] %v1660
        %1666 = vst [vmem:[#allocation6 + $0x20] sm:$0x3f] %v1661
        %v1667 = vld [vmem:[#allocation6] ss:$2 sm:$0xff]
        %s1668 = scalar_lea.vmem [#allocation6], 16
        %v1669 = vld [vmem:[%s1668] ss:$2 sm:$0xff]
        %s1670 = scalar_lea.vmem [#allocation6], 32
        %v1671 = vld [vmem:[%s1670] ss:$2 sm:$0x7]
        %s1672 = scalar_lea.vmem [#allocation6], 1
        %v1673 = vld [vmem:[%s1672] ss:$2 sm:$0xff]
        %s1674 = scalar_lea.vmem [#allocation6], 17
        %v1675 = vld [vmem:[%s1674] ss:$2 sm:$0xff]
        %s1676 = scalar_lea.vmem [#allocation6], 33
        %v1677 = vld [vmem:[%s1676] ss:$2 sm:$0x7]
        %v1678 = vmax.f32 %v1667, %v1673
        %v1679 = vmax.f32 %v1669, %v1675
        %v1680 = vmax.f32 %v1671, %v1677
        %v1681 = vld [vmem:[%s10] sm:$0x3]
        %v1682 = vpack.c.bf16 %v1679, %v1678
        %v1683 = vpack.c.bf16 %v1680, %v1680
        %vm1684 = vcmask 154624
        %v1686 = vsel %vm1684, %v1681, 0
        %vm1688 = vcmask 1040384
        %vm1689 = vcmask 1041408
        %v1690 = vsel %vm1688, 4294967295, 65535
        %v1691 = vsel %vm1689, %v1690, 0
        %v1693 = vand.u32 %v1683, %v1691
        %1695 = vmatprep.subr.bf16.mxu0 0
        %1696 = vmatpush1.bf16.msra.mxu0 0
        %1697 = vmatprep.subr.bf16.mxu0 0
        %1698 = vmatpush1.bf16.msra.mxu0 0
        %1699 = vmatprep.subr.bf16.mxu0 0
        %1700 = vmatpush1.bf16.msra.mxu0 0
        %1701 = vmatprep.subr.bf16.mxu0 0
        %1702 = vmatpush1.bf16.msra.mxu0 0
        %1703 = vmatprep.subr.bf16.mxu0 0
        %1704 = vmatpush1.bf16.msra.mxu0 0
        %1705 = vmatprep.subr.bf16.mxu0 0
        %1706 = vmatpush1.bf16.msra.mxu0 0
        %1707 = vmatprep.subr.bf16.mxu0 0
        %1708 = vmatpush1.bf16.msra.mxu0 %v1693
        %1709 = vmatprep.subr.bf16.mxu0 0
        %1710 = vmatpush1.bf16.msra.mxu0 %v1682
        %1711 = vmatprep.subr.bf16.mxu0 0
        %1712 = vmatpush2.bf16.msra.mxu0 0
        %1713 = vmatprep.subr.bf16.mxu0 0
        %1714 = vmatpush2.bf16.msra.mxu0 0
        %1715 = vmatprep.subr.bf16.mxu0 0
        %1716 = vmatpush2.bf16.msra.mxu0 0
        %1717 = vmatprep.subr.bf16.mxu0 0
        %1718 = vmatpush2.bf16.msra.mxu0 0
        %1719 = vmatprep.subr.bf16.mxu0 0
        %1720 = vmatpush2.bf16.msra.mxu0 0
        %1721 = vmatprep.subr.bf16.mxu0 0
        %1722 = vmatpush2.bf16.msra.mxu0 0
        %1723 = vmatprep.subr.bf16.mxu0 0
        %1724 = vmatpush2.bf16.msra.mxu0 0
        %1725 = vmatprep.subr.bf16.mxu0 0
        %1726 = vmatpush2.bf16.msra.mxu0 0
        %1727 = vmatprep.mubr.bf16.mxu0 0
        %1728 = vmatmul.mubr.bf16.gmra.mxu0 %v1686
        %v1729 = vpop.f32.mrf.mxu0
        %v1730 = vadd.f32 0.0, %v1729
        %v1731 = vpop.f32.mrf.mxu0
        %v1732 = vpop.f32.mrf.mxu0
        %v1733 = vpop.f32.mrf.mxu0
        %1734 = vdwg.mxu0
        %v1735 = vpack.c.bf16 %v1730, %v1730
        %v1736 = vld [vmem:[%s11] sm:$0xf]
        %v1737 = vld [vmem:[%s11 + $0x4] sm:$0xf]
        %v1738 = vld [vmem:[%s11 + $0x8] sm:$0xf]
        %v1739 = vld [vmem:[%s11 + $0xc] sm:$0xf]
        %v1740 = vld [vmem:[%s11 + $0x10] sm:$0xf]
        %v1741 = vld [vmem:[%s11 + $0x14] sm:$0xf]
        %v1742 = vld [vmem:[%s11 + $0x18] sm:$0xf]
        %v1743 = vld [vmem:[%s11 + $0x1c] sm:$0xf]
        %v1744 = vld [vmem:[%s11 + $0x20] sm:$0xf]
        %v1745 = vld [vmem:[%s11 + $0x24] sm:$0xf]
        %v1746 = vld [vmem:[%s11 + $0x28] sm:$0xf]
        %v1747 = vld [vmem:[%s11 + $0x2c] sm:$0xf]
        %v1748 = vld [vmem:[%s11 + $0x30] sm:$0xf]
        %v1749 = vld [vmem:[%s11 + $0x34] sm:$0xf]
        %v1750 = vld [vmem:[%s11 + $0x38] sm:$0xf]
        %v1751 = vld [vmem:[%s11 + $0x3c] sm:$0xf]
        %v1752 = vld [vmem:[%s12] sm:$0x1]
        %v1754 = vlaneseq
        %v1755 = vshrl.u32 %v1754, 7
        %v1756 = vsub.s32 0, %v1755
        %v1757 = vrot.slane %v1752, %v1756
        %v1775 = vunpack.c.l.b16 %v1736
        %v1776 = vunpack.c.l.b16 %v1737
        %v1777 = vunpack.c.l.b16 %v1738
        %v1778 = vunpack.c.l.b16 %v1739
        %v1779 = vunpack.c.l.b16 %v1740
        %v1780 = vunpack.c.l.b16 %v1741
        %v1781 = vunpack.c.l.b16 %v1742
        %v1782 = vunpack.c.l.b16 %v1743
        %v1783 = vunpack.c.l.b16 %v1744
        %v1784 = vunpack.c.l.b16 %v1745
        %v1785 = vunpack.c.l.b16 %v1746
        %v1786 = vunpack.c.l.b16 %v1747
        %v1787 = vunpack.c.l.b16 %v1748
        %v1788 = vunpack.c.l.b16 %v1749
        %v1789 = vunpack.c.l.b16 %v1750
        %v1790 = vunpack.c.l.b16 %v1751
        %v1791 = vpack.c.b16 %v1776, %v1775
        %v1792 = vpack.c.b16 %v1778, %v1777
        %v1793 = vpack.c.b16 %v1780, %v1779
        %v1794 = vpack.c.b16 %v1782, %v1781
        %v1795 = vpack.c.b16 %v1784, %v1783
        %v1796 = vpack.c.b16 %v1786, %v1785
        %v1797 = vpack.c.b16 %v1788, %v1787
        %v1798 = vpack.c.b16 %v1790, %v1789
        %1807 = vmatprep.subr.bf16.mxu0 0
        %1808 = vmatpush1.bf16.msra.mxu0 %v1798
        %1809 = vmatprep.subr.bf16.mxu0 0
        %1810 = vmatpush1.bf16.msra.mxu0 %v1797
        %1811 = vmatprep.subr.bf16.mxu0 0
        %1812 = vmatpush1.bf16.msra.mxu0 %v1796
        %1813 = vmatprep.subr.bf16.mxu0 0
        %1814 = vmatpush1.bf16.msra.mxu0 %v1795
        %1815 = vmatprep.subr.bf16.mxu0 0
        %1816 = vmatpush1.bf16.msra.mxu0 %v1794
        %1817 = vmatprep.subr.bf16.mxu0 0
        %1818 = vmatpush1.bf16.msra.mxu0 %v1793
        %1819 = vmatprep.subr.bf16.mxu0 0
        %1820 = vmatpush1.bf16.msra.mxu0 %v1792
        %1821 = vmatprep.subr.bf16.mxu0 0
        %1822 = vmatpush1.bf16.msra.mxu0 %v1791
        %1823 = vmatprep.subr.bf16.mxu0 0
        %1824 = vmatpush2.bf16.msra.mxu0 0
        %1825 = vmatprep.subr.bf16.mxu0 0
        %1826 = vmatpush2.bf16.msra.mxu0 0
        %1827 = vmatprep.subr.bf16.mxu0 0
        %1828 = vmatpush2.bf16.msra.mxu0 0
        %1829 = vmatprep.subr.bf16.mxu0 0
        %1830 = vmatpush2.bf16.msra.mxu0 0
        %1831 = vmatprep.subr.bf16.mxu0 0
        %1832 = vmatpush2.bf16.msra.mxu0 0
        %1833 = vmatprep.subr.bf16.mxu0 0
        %1834 = vmatpush2.bf16.msra.mxu0 0
        %1835 = vmatprep.subr.bf16.mxu0 0
        %1836 = vmatpush2.bf16.msra.mxu0 0
        %1837 = vmatprep.subr.bf16.mxu0 0
        %1838 = vmatpush2.bf16.msra.mxu0 0
        %1839 = vmatprep.mubr.bf16.mxu0 0
        %1840 = vmatmul.mubr.bf16.gmra.mxu0 %v1735
        %v1841 = vpop.f32.mrf.mxu0
        %v1842 = vadd.f32 %v1757, %v1841
        %v1843 = vpop.f32.mrf.mxu0
        %v1844 = vpop.f32.mrf.mxu0
        %v1845 = vpop.f32.mrf.mxu0
        %1846 = vdwg.mxu0
        %v1847 = vmax.f32 %v1842, 0.0
        %v1848 = vpack.c.bf16 %v1847, %v1847
        %v1849 = vld [vmem:[%s13] sm:$0xf]
        %v1850 = vld [vmem:[%s13 + $0x4] sm:$0xf]
        %v1851 = vld [vmem:[%s13 + $0x8] sm:$0xf]
        %v1852 = vld [vmem:[%s13 + $0xc] sm:$0xf]
        %v1853 = vld [vmem:[%s13 + $0x10] sm:$0xf]
        %v1854 = vld [vmem:[%s13 + $0x14] sm:$0xf]
        %v1855 = vld [vmem:[%s13 + $0x18] sm:$0xf]
        %v1856 = vld [vmem:[%s13 + $0x1c] sm:$0xf]
        %v1857 = vld [vmem:[%s13 + $0x20] sm:$0xf]
        %v1858 = vld [vmem:[%s13 + $0x24] sm:$0xf]
        %v1859 = vld [vmem:[%s13 + $0x28] sm:$0xf]
        %v1860 = vld [vmem:[%s13 + $0x2c] sm:$0xf]
        %v1861 = vld [vmem:[%s13 + $0x30] sm:$0xf]
        %v1862 = vld [vmem:[%s13 + $0x34] sm:$0xf]
        %v1863 = vld [vmem:[%s13 + $0x38] sm:$0xf]
        %v1864 = vld [vmem:[%s13 + $0x3c] sm:$0xf]
        %v1865 = vld [vmem:[%s14] sm:$0x1]
        %v1867 = vlaneseq
        %v1868 = vshrl.u32 %v1867, 7
        %v1869 = vsub.s32 0, %v1868
        %v1870 = vrot.slane %v1865, %v1869
        %v1888 = vunpack.c.l.b16 %v1849
        %v1889 = vunpack.c.l.b16 %v1850
        %v1890 = vunpack.c.l.b16 %v1851
        %v1891 = vunpack.c.l.b16 %v1852
        %v1892 = vunpack.c.l.b16 %v1853
        %v1893 = vunpack.c.l.b16 %v1854
        %v1894 = vunpack.c.l.b16 %v1855
        %v1895 = vunpack.c.l.b16 %v1856
        %v1896 = vunpack.c.l.b16 %v1857
        %v1897 = vunpack.c.l.b16 %v1858
        %v1898 = vunpack.c.l.b16 %v1859
        %v1899 = vunpack.c.l.b16 %v1860
        %v1900 = vunpack.c.l.b16 %v1861
        %v1901 = vunpack.c.l.b16 %v1862
        %v1902 = vunpack.c.l.b16 %v1863
        %v1903 = vunpack.c.l.b16 %v1864
        %v1904 = vpack.c.b16 %v1889, %v1888
        %v1905 = vpack.c.b16 %v1891, %v1890
        %v1906 = vpack.c.b16 %v1893, %v1892
        %v1907 = vpack.c.b16 %v1895, %v1894
        %v1908 = vpack.c.b16 %v1897, %v1896
        %v1909 = vpack.c.b16 %v1899, %v1898
        %v1910 = vpack.c.b16 %v1901, %v1900
        %v1911 = vpack.c.b16 %v1903, %v1902
        %1920 = vmatprep.subr.bf16.mxu0 0
        %1921 = vmatpush1.bf16.msra.mxu0 %v1911
        %1922 = vmatprep.subr.bf16.mxu0 0
        %1923 = vmatpush1.bf16.msra.mxu0 %v1910
        %1924 = vmatprep.subr.bf16.mxu0 0
        %1925 = vmatpush1.bf16.msra.mxu0 %v1909
        %1926 = vmatprep.subr.bf16.mxu0 0
        %1927 = vmatpush1.bf16.msra.mxu0 %v1908
        %1928 = vmatprep.subr.bf16.mxu0 0
        %1929 = vmatpush1.bf16.msra.mxu0 %v1907
        %1930 = vmatprep.subr.bf16.mxu0 0
        %1931 = vmatpush1.bf16.msra.mxu0 %v1906
        %1932 = vmatprep.subr.bf16.mxu0 0
        %1933 = vmatpush1.bf16.msra.mxu0 %v1905
        %1934 = vmatprep.subr.bf16.mxu0 0
        %1935 = vmatpush1.bf16.msra.mxu0 %v1904
        %1936 = vmatprep.subr.bf16.mxu0 0
        %1937 = vmatpush2.bf16.msra.mxu0 0
        %1938 = vmatprep.subr.bf16.mxu0 0
        %1939 = vmatpush2.bf16.msra.mxu0 0
        %1940 = vmatprep.subr.bf16.mxu0 0
        %1941 = vmatpush2.bf16.msra.mxu0 0
        %1942 = vmatprep.subr.bf16.mxu0 0
        %1943 = vmatpush2.bf16.msra.mxu0 0
        %1944 = vmatprep.subr.bf16.mxu0 0
        %1945 = vmatpush2.bf16.msra.mxu0 0
        %1946 = vmatprep.subr.bf16.mxu0 0
        %1947 = vmatpush2.bf16.msra.mxu0 0
        %1948 = vmatprep.subr.bf16.mxu0 0
        %1949 = vmatpush2.bf16.msra.mxu0 0
        %1950 = vmatprep.subr.bf16.mxu0 0
        %1951 = vmatpush2.bf16.msra.mxu0 0
        %1952 = vmatprep.mubr.bf16.mxu0 0
        %1953 = vmatmul.mubr.bf16.gmra.mxu0 %v1848
        %v1954 = vpop.f32.mrf.mxu0
        %v1955 = vadd.f32 %v1870, %v1954
        %v1956 = vpop.f32.mrf.mxu0
        %v1957 = vpop.f32.mrf.mxu0
        %v1958 = vpop.f32.mrf.mxu0
        %1959 = vdwg.mxu0
        %1960 = vst [vmem:[%s502] sm:$0xf] %v1955
        %s1961 = sand.u32 %s358, 1
        %s1962 = scalar_lea.sflag [#allocation9], %s1961
        %s1963 = sand.u32 %s358, 1
        %s1964 = smul.addr %s1963, 4
        %s1965 = scalar_lea.vmem [#allocation10], %s1964
        // Predicated region
        $region85: #{tpu_custom_call.1} parent=79 // pred_check
          %p1966 = pneg %p368
        $region86: #{tpu_custom_call.1} parent=79 // pred_check_branch
          %1968 = sbr.rel (%p1966) target = $region88
        $region87: #{tpu_custom_call.1} parent=79 // pred_region
          %s1970 = ssub.s32 64, 64
          %1971 = vsyncadd %s1962, %s1970
          %s1972 = smul.addr %s30, 64
          %s1973 = scalar_lea.hbm %s15, %s1972
          %s1975 = sshll.u32 %s1965, 4
          %s1976 = int_to_ptr.vmem [resolvable:$true] %s1975
          %1978 = dma.vmem_to_hbm [thread:$0]  %s1976, 64, %s1973, %s1962
        $region88: #{tpu_custom_call.1} parent=79 // pred_fallthru
          _
      $region80: #{tpu_custom_call.1} parent=5 // pred_fallthru
        _
      %p1979 = scmp.le.s32.totalorder 2, %s25
      // Predicated region
      $region89: #{tpu_custom_call.1} parent=5 // pred_check
        %p1980 = pneg %p1979
      $region90: #{tpu_custom_call.1} parent=5 // pred_check_branch
        %1982 = sbr.rel (%p1980) target = $region92
      $region91: #{tpu_custom_call.1} parent=5 // pred_region
        %s1983 = ssub.s32 %s25, 2
        // Predicated region
        $region93: #{tpu_custom_call.1} parent=91 // pred_check
          %p1984 = pneg %p374
        $region94: #{tpu_custom_call.1} parent=91 // pred_check_branch
          %1986 = sbr.rel (%p1984) target = $region96
        $region95: #{tpu_custom_call.1} parent=91 // pred_region
          %s1987 = sand.u32 %s359, 1
          %s1988 = scalar_lea.sflag [#allocation9], %s1987
          %s1989 = sand.u32 %s359, 1
          %s1990 = smul.addr %s1989, 4
          %s1991 = scalar_lea.vmem [#allocation10], %s1990
          %1992 = dma.done %s1988, 64
        $region96: #{tpu_custom_call.1} parent=91 // pred_fallthru
          _
      $region92: #{tpu_custom_call.1} parent=5 // pred_fallthru
        _
    $region6: #{tpu_custom_call.1} parent=1 // loop_footer
      %s29 = sadd.s32 1, %s25
    $region7: #{tpu_custom_call.1} parent=1 // loop_footer_branch
      %24 = sbr.rel target = $region3
    $region8: #{tpu_custom_call.1} parent=1 // loop_exit
      _
    %1993 = vsyncpa [#allocation8], 1
    %s1994 = scalar_lea.sflag [#allocation8], 1
    %1995 = vsyncpa %s1994, 1
    %1996 = vsyncpa [#allocation9], 1
    %s1997 = scalar_lea.sflag [#allocation9], 1
    %1998 = vsyncpa %s1997, 1

</llo_original>
